<compile_context>
chip_gen: v7x
topology: tpu7x:2x2x1
jax: 0.10.0
libtpu: 0.0.40
codegen_flags: <defaults>
</compile_context>

<pallas_src>
import functools

import jax
import jax.numpy as jnp
from jax.experimental import pallas as pl
from jax.experimental.pallas import tpu as pltpu

K = 7            # conv kernel size
PAD = 3          # conv padding ('same')
NUM_CLASSES = 7
BN_EPS = 1e-5
VMEM_LIMIT = 48 * 1024 * 1024    # <= v7x's 64 MiB physical VMEM, fine on v5e/v6e


# ----------------------------------------------------------------------------
# Conv + BN(eval, folded) + ReLU (+ optional 2x2 max-pool) kernel
# ----------------------------------------------------------------------------
def _conv_bn_relu_kernel(x_ref, w_ref, s_ref, b_ref, o_ref, *, N, H, W, KK, pool):
    # x_ref: (N, H+KK-1, W+KK-1, Cin) f32   whole (padded) batch
    # w_ref: (KK, KK*Cin, cb)         bf16  one output-channel tile
    # s_ref, b_ref: (1, cb)           f32   folded BatchNorm scale / bias
    # o_ref: (N, Ho, Wo, cb)          f32
    cb = w_ref.shape[-1]
    M = N * H * W
    x = x_ref[...]

    # Width-im2col: KK misaligned slices total (instead of KK*KK); after this,
    # the kh shift only slices the major H axis, which is free.
    if KK == 1:
        xu = x
    else:
        xu = jnp.concatenate([x[:, :, kw:kw + W, :] for kw in range(KK)], axis=-1)
    xu = xu.astype(jnp.bfloat16)                      # (N, H+KK-1, W, KK*Cin)
    kc = xu.shape[-1]

    def tap(kh):
        patch = xu[:, kh:kh + H].reshape(M, kc)       # batch folded into MXU M dim
        return jnp.dot(patch, w_ref[kh], preferred_element_type=jnp.float32)

    acc = tap(0)
    for kh in range(1, KK):
        acc = acc + tap(kh)

    y = jnp.maximum(acc * s_ref[0] + b_ref[0], 0.0)   # folded BN (eval) + ReLU
    y = y.reshape(N, H, W, cb)
    if pool:                                          # MaxPool2d(2), per image
        for n in range(N):
            pn = y[n].reshape(H // 2, 2, W // 2, 2, cb).max(axis=3).max(axis=1)
            o_ref[n] = pn.astype(o_ref.dtype)
    else:
        o_ref[...] = y.astype(o_ref.dtype)


def conv_bn_relu(x, w, scale, bias, *, pool=False, kk=K):
    # x: (N, H, W, Cin) f32, w: (kk, kk*Cin, Cout) bf16, scale/bias: (Cout,) f32
    N, H, W, Cin = x.shape
    Cout = w.shape[-1]
    cb = min(Cout, 128)                               # output-channel tile (MXU width)
    Ho, Wo = (H // 2, W // 2) if pool else (H, W)
    pad = kk // 2
    xp = jnp.pad(x, ((0, 0), (pad, pad), (pad, pad), (0, 0))) if pad else x
    Hp, Wp = H + 2 * pad, W + 2 * pad

    kernel = functools.partial(_conv_bn_relu_kernel,
                               N=N, H=H, W=W, KK=kk, pool=pool)
    return pl.pallas_call(
        kernel,
        out_shape=jax.ShapeDtypeStruct((N, Ho, Wo, Cout), jnp.float32),
        grid_spec=pltpu.PrefetchScalarGridSpec(
            num_scalar_prefetch=0,
            grid=(Cout // cb,),                       # weights fetched once per layer
            in_specs=[
                pl.BlockSpec((N, Hp, Wp, Cin), lambda c: (0, 0, 0, 0)),
                pl.BlockSpec((kk, kk * Cin, cb), lambda c: (0, 0, c)),
                pl.BlockSpec((1, cb), lambda c: (0, c)),
                pl.BlockSpec((1, cb), lambda c: (0, c)),
            ],
            out_specs=pl.BlockSpec((N, Ho, Wo, cb), lambda c: (0, 0, 0, c)),
        ),
        compiler_params=pltpu.CompilerParams(
            dimension_semantics=("parallel",),        # v7x: split Cout tiles across TCs
            vmem_limit_bytes=VMEM_LIMIT,
        ),
    )(xp, w, scale.reshape(1, Cout), bias.reshape(1, Cout))


def conv1_im2col(x):
    # x: (N, H, W, 1) f32 -> (N, H, W, 49).  Column order kh*K + kw matches the
    # conv1 weight reshape (K, K, 1, Cout) -> (1, K*K, Cout).
    N, H, W, _ = x.shape
    xp = jnp.pad(x, ((0, 0), (PAD, PAD), (PAD, PAD), (0, 0)))
    cols = [xp[:, kh:kh + H, kw:kw + W, 0] for kh in range(K) for kw in range(K)]
    return jnp.stack(cols, axis=-1)


# ----------------------------------------------------------------------------
# Classifier kernel: MaxPool2d(4) + Flatten + Dropout(eval) + Linear(512, 7)
# ----------------------------------------------------------------------------
def _classifier_kernel(x_ref, w_ref, b_ref, o_ref):
    # x_ref: (N, 4, 4, 512), w_ref: (512, 7), b_ref: (1, 7), o_ref: (N, 7)
    x = x_ref[...]
    n, h, w, c = x.shape
    pooled = x.reshape(n, h * w, c).max(axis=1)        # global 4x4 max-pool -> (N, 512)
    # TODO(synk): nn.Dropout(0.2) is inference-mode identity here (no RNG mask).
    logits = jnp.dot(pooled, w_ref[...], preferred_element_type=jnp.float32)
    o_ref[...] = (logits + b_ref[0]).astype(o_ref.dtype)


def classifier(x, w, b):
    N, H, W, C = x.shape
    nc = w.shape[-1]
    return pl.pallas_call(
        _classifier_kernel,
        out_shape=jax.ShapeDtypeStruct((N, nc), jnp.float32),
        grid_spec=pltpu.PrefetchScalarGridSpec(
            num_scalar_prefetch=0,
            grid=(1,),
            in_specs=[
                pl.BlockSpec((N, H, W, C), lambda i: (0, 0, 0, 0)),
                pl.BlockSpec((C, nc), lambda i: (0, 0)),
                pl.BlockSpec((1, nc), lambda i: (0, 0)),
            ],
            out_specs=pl.BlockSpec((N, nc), lambda i: (0, 0)),
        ),
        compiler_params=pltpu.CompilerParams(vmem_limit_bytes=VMEM_LIMIT),
    )(x, w, b.reshape(1, nc))


# ----------------------------------------------------------------------------
# Deterministic parameter init (matches module __init__ shapes; eval-mode BN folded)
# ----------------------------------------------------------------------------
def _conv_block_params(key, cin, cout):
    k1, k2, k3, k4, k5, k6 = jax.random.split(key, 6)
    w = jax.random.normal(k1, (K, K, cin, cout), jnp.float32) * jnp.sqrt(
        2.0 / (K * K * cin))
    conv_b = jax.random.normal(k2, (cout,), jnp.float32) * 0.01
    gamma = jax.random.uniform(k3, (cout,), jnp.float32, 0.8, 1.2)
    beta = jax.random.normal(k4, (cout,), jnp.float32) * 0.05
    run_mean = jax.random.normal(k5, (cout,), jnp.float32) * 0.05
    run_var = jax.random.uniform(k6, (cout,), jnp.float32, 0.8, 1.2)
    scale = gamma / jnp.sqrt(run_var + BN_EPS)           # fold BN (eval mode)
    bias = beta + (conv_b - run_mean) * scale
    if cin == 1:   # conv1 is lowered to an im2col matmul (KK=1 path)
        wr = w.reshape(1, K * K, cout).astype(jnp.bfloat16)
    else:
        wr = w.reshape(K, K * cin, cout).astype(jnp.bfloat16)
    return {"w": wr, "scale": scale, "bias": bias}


def init_params(key):
    names_dims = [
        ("conv1", 1, 64), ("conv2", 64, 128),
        ("res1a", 128, 128), ("res1b", 128, 128),
        ("conv3", 128, 256), ("conv4", 256, 512),
        ("res2a", 512, 512), ("res2b", 512, 512),
    ]
    keys = jax.random.split(key, len(names_dims) + 2)
    params = {name: _conv_block_params(k, cin, cout)
              for (name, cin, cout), k in zip(names_dims, keys[:-2])}
    params["fc_w"] = jax.random.normal(keys[-2], (512, NUM_CLASSES),
                                       jnp.float32) * (1.0 / jnp.sqrt(512.0))
    params["fc_b"] = jax.random.normal(keys[-1], (NUM_CLASSES,),
                                       jnp.float32) * 0.01
    return params


# ----------------------------------------------------------------------------
# Forward pass (mirrors FacialEmotionConvolutionalModel.forward, eval mode)
# ----------------------------------------------------------------------------
def forward(params, xb_nchw):
    x = jnp.transpose(xb_nchw, (0, 2, 3, 1))                  # NCHW -> NHWC
    x = conv1_im2col(x)                                       # (N,32,32,49)
    out = conv_bn_relu(x, **params["conv1"], kk=1)            # conv1 as one matmul
    out = conv_bn_relu(out, **params["conv2"], pool=True)     # conv2 + pool
    res = conv_bn_relu(out, **params["res1a"])
    res = conv_bn_relu(res, **params["res1b"])
    out = res + out                                           # res1 + skip
    out = conv_bn_relu(out, **params["conv3"], pool=True)     # conv3 + pool
    out = conv_bn_relu(out, **params["conv4"], pool=True)     # conv4 + pool
    res = conv_bn_relu(out, **params["res2a"])
    res = conv_bn_relu(res, **params["res2b"])
    out = res + out                                           # res2 + skip
    return classifier(out, params["fc_w"], params["fc_b"])    # -> (N, 7)


if __name__ == "__main__":
    key = jax.random.PRNGKey(0)
    pkey, xkey = jax.random.split(key)
    params = init_params(pkey)
    # batch=2, 1 channel, 32x32 -> conv4 output is 4x4x512 so MaxPool(4) flattens to 512
    xb = jax.random.normal(xkey, (2, 1, 32, 32), jnp.float32)   # NCHW like PyTorch
    out = jax.block_until_ready(forward(params, xb))
    assert out.shape == (2, NUM_CLASSES)
    assert bool(jnp.all(jnp.isfinite(out)))
    print("KERNEL_OK")
</pallas_src>

<mosaic_0001>
module attributes {stable_mosaic.version = 11 : i64} {
  func.func @_conv_bn_relu_kernel(%arg0: i32, %arg1: memref<2x32x32x49xf32, #tpu.memory_space<vmem>>, %arg2: memref<1x49x64xbf16, #tpu.memory_space<vmem>>, %arg3: memref<1x64xf32, #tpu.memory_space<vmem>>, %arg4: memref<1x64xf32, #tpu.memory_space<vmem>>, %arg5: memref<2x32x32x64xf32, #tpu.memory_space<vmem>>) attributes {dimension_semantics = [#tpu.dimension_semantics<parallel>], iteration_bounds = array<i64: 1>, scalar_prefetch = 0 : i64, scratch_operands = 0 : i64, tpu.core_type = #tpu.core_type<tc>, window_params = [{pipeline_mode = #tpu.pipeline_mode<synchronous>, transform_indices = @transform_0, window_bounds = array<i64: 2, 32, 32, 49>}, {transform_indices = @transform_1, window_bounds = array<i64: 1, 49, 64>}, {transform_indices = @transform_2, window_bounds = array<i64: 1, 64>}, {transform_indices = @transform_3, window_bounds = array<i64: 1, 64>}, {transform_indices = @transform_4, window_bounds = array<i64: 2, 32, 32, 64>}]} {
    %c0 = arith.constant 0 : index
    %c0_0 = arith.constant 0 : index
    %c0_1 = arith.constant 0 : index
    %c0_2 = arith.constant 0 : index
    %0 = vector.load %arg1[%c0, %c0_0, %c0_1, %c0_2] : memref<2x32x32x49xf32, #tpu.memory_space<vmem>>, vector<2x32x32x49xf32>
    %1 = arith.truncf %0 : vector<2x32x32x49xf32> to vector<2x32x32x49xbf16>
    %2 = vector.shape_cast %1 : vector<2x32x32x49xbf16> to vector<2048x49xbf16>
    %c0_3 = arith.constant 0 : index
    %c0_4 = arith.constant 0 : index
    %c0_5 = arith.constant 0 : index
    %3 = vector.load %arg2[%c0_3, %c0_4, %c0_5] : memref<1x49x64xbf16, #tpu.memory_space<vmem>>, vector<1x49x64xbf16>
    %4 = vector.shape_cast %3 : vector<1x49x64xbf16> to vector<49x64xbf16>
    %cst = arith.constant dense<0.000000e+00> : vector<2048x64xf32>
    %5 = tpu.matmul %2, %4, %cst {dimension_numbers = #tpu.dot_dimension_numbers<[1], [0], [0], [1], [0, 0, 1, 1], [], []>} : vector<2048x49xbf16>, vector<49x64xbf16>, vector<2048x64xf32> -> vector<2048x64xf32>
    %c0_6 = arith.constant 0 : index
    %c0_7 = arith.constant 0 : index
    %6 = vector.load %arg3[%c0_6, %c0_7] : memref<1x64xf32, #tpu.memory_space<vmem>>, vector<1x64xf32>
    %7 = vector.shape_cast %6 : vector<1x64xf32> to vector<64xf32>
    %8 = vector.shape_cast %7 : vector<64xf32> to vector<1x64xf32>
    %9 = vector.broadcast %8 : vector<1x64xf32> to vector<2048x64xf32>
    %10 = arith.mulf %5, %9 : vector<2048x64xf32>
    %c0_8 = arith.constant 0 : index
    %c0_9 = arith.constant 0 : index
    %11 = vector.load %arg4[%c0_8, %c0_9] : memref<1x64xf32, #tpu.memory_space<vmem>>, vector<1x64xf32>
    %12 = vector.shape_cast %11 : vector<1x64xf32> to vector<64xf32>
    %13 = vector.shape_cast %12 : vector<64xf32> to vector<1x64xf32>
    %14 = vector.broadcast %13 : vector<1x64xf32> to vector<2048x64xf32>
    %15 = arith.addf %10, %14 : vector<2048x64xf32>
    %cst_10 = arith.constant 0.000000e+00 : f32
    %16 = vector.broadcast %cst_10 : f32 to vector<2048x64xf32>
    %17 = arith.maximumf %15, %16 : vector<2048x64xf32>
    %18 = vector.shape_cast %17 : vector<2048x64xf32> to vector<2x32x32x64xf32>
    %c0_11 = arith.constant 0 : index
    %c0_12 = arith.constant 0 : index
    %c0_13 = arith.constant 0 : index
    %c0_14 = arith.constant 0 : index
    %19 = vector.load %arg5[%c0_11, %c0_12, %c0_13, %c0_14] : memref<2x32x32x64xf32, #tpu.memory_space<vmem>>, vector<2x32x32x64xf32>
    tpu.vector_store %arg5[%c0_11, %c0_12, %c0_13, %c0_14], %18 {strides = array<i32>} : memref<2x32x32x64xf32, #tpu.memory_space<vmem>>, vector<2x32x32x64xf32>,
    return
  }
  func.func @transform_0(%arg0: i32) -> (i32, i32, i32, i32) {
    %c0_i32 = arith.constant 0 : i32
    %c0_i32_0 = arith.constant 0 : i32
    %c0_i32_1 = arith.constant 0 : i32
    %c0_i32_2 = arith.constant 0 : i32
    %c0_i32_3 = arith.constant 0 : i32
    return %c0_i32, %c0_i32_0, %c0_i32_1, %c0_i32_2 : i32, i32, i32, i32
  }
  func.func @transform_1(%arg0: i32) -> (i32, i32, i32) {
    %c0_i32 = arith.constant 0 : i32
    %c0_i32_0 = arith.constant 0 : i32
    %c0_i32_1 = arith.constant 0 : i32
    return %c0_i32, %c0_i32_0, %arg0 : i32, i32, i32
  }
  func.func @transform_2(%arg0: i32) -> (i32, i32) {
    %c0_i32 = arith.constant 0 : i32
    %c0_i32_0 = arith.constant 0 : i32
    return %c0_i32, %arg0 : i32, i32
  }
  func.func @transform_3(%arg0: i32) -> (i32, i32) {
    %c0_i32 = arith.constant 0 : i32
    %c0_i32_0 = arith.constant 0 : i32
    return %c0_i32, %arg0 : i32, i32
  }
  func.func @transform_4(%arg0: i32) -> (i32, i32, i32, i32) {
    %c0_i32 = arith.constant 0 : i32
    %c0_i32_0 = arith.constant 0 : i32
    %c0_i32_1 = arith.constant 0 : i32
    %c0_i32_2 = arith.constant 0 : i32
    return %c0_i32, %c0_i32_0, %c0_i32_1, %arg0 : i32, i32, i32, i32
  }
}

</mosaic_0001>

<llo_original>
// kernel: tpu_custom_call.1
$region0: #{tpu_custom_call.1}
  #allocation0 [shape = 'u32[]', space=smem, size = 0x4, offset = 0x4, fixed_abs, tag = 'smem constant byte address 0x4 - core index']
  #allocation1 [shape = 'u32[144,128]{1,0:T(1,128)}', space=vmem, size = 0x12000, scoped, tag = 'internal scratch']
  %s0 = inlined_call_operand.hbm [shape: f32[2,32,32,49], index: 0, kind: input, shape index: {}]
  %s1 = inlined_call_operand.hbm [shape: bf16[1,49,64], index: 1, kind: input, shape index: {}]
  %s2 = inlined_call_operand.vmem [shape: f32[1,64], index: 2, kind: input, shape index: {}]
  %s3 = inlined_call_operand.vmem [shape: f32[1,64], index: 3, kind: input, shape index: {}]
  %s4 = inlined_call_operand.hbm [shape: f32[2,32,32,64], index: 4, kind: output, shape index: {}]
  %s5 = sld [smem:[#allocation0]]
  $region34: #{tpu_custom_call.1} parent=0
    _
  %s7 = ssub.s32 1, %s5
  %s8 = scalar_select 0, %s7, %s5
  $region1: #{tpu_custom_call.1} parent=0
    #allocation2 [shape = 'u8[1048576]{0}', space=vmem, size = 0x100000, scoped, tag = 'input window, operand 0, single buffered']
    #allocation3 [shape = 's32[1]{0}', space=sflag, size = 0x4, scoped, tag = 'scoped memory for tpu_custom_call.1']
    #allocation4 [shape = 's32[1]{0}', space=sflag, size = 0x4, scoped, tag = 'scoped memory for tpu_custom_call.1']
    #allocation5 [shape = 'u8[14336]{0}', space=vmem, size = 0x3800, scoped, tag = 'input window, operand 1, single buffered']
    #allocation6 [shape = 's32[1]{0}', space=sflag, size = 0x4, scoped, tag = 'scoped memory for tpu_custom_call.1']
    #allocation7 [shape = 'u8[1048576]{0}', space=vmem, size = 0x100000, scoped, tag = 'output window, operand 0, single buffered']
    %9 = vsyncpa [#allocation3], 0
    %10 = vsyncpa [#allocation6], 0
    %11 = vsyncpa [#allocation4], 0
    // Predicated region
    $region2: #{tpu_custom_call.1} parent=1 // pred_check
      _
    $region3: #{tpu_custom_call.1} parent=1 // pred_check_branch
      %13 = sbr.rel (0) target = $region5
    $region4: #{tpu_custom_call.1} parent=1 // pred_region
      %s15 = ssub.s32 32768, 32768
      %16 = vsyncadd [#allocation3], %s15
      %s17 = sshll.u32 [#allocation2], 4
      %s18 = int_to_ptr.vmem [resolvable:$true] %s17
      %23 = dma.hbm_to_vmem [thread:$0]  %s0, 32768, %s18, [#allocation3], 128, 128, 8
    $region5: #{tpu_custom_call.1} parent=1 // pred_fallthru
      _
    // Predicated region
    $region6: #{tpu_custom_call.1} parent=1 // pred_check
      _
    $region7: #{tpu_custom_call.1} parent=1 // pred_check_branch
      %25 = sbr.rel (0) target = $region9
    $region8: #{tpu_custom_call.1} parent=1 // pred_region
      %s27 = ssub.s32 448, 448
      %28 = vsyncadd [#allocation6], %s27
      %s29 = sshll.u32 [#allocation5], 4
      %s30 = int_to_ptr.vmem [resolvable:$true] %s29
      %35 = dma.hbm_to_vmem [thread:$0]  %s1, 448, %s30, [#allocation6], 64, 64, 4
    $region9: #{tpu_custom_call.1} parent=1 // pred_fallthru
      _
    // Predicated region
    $region10: #{tpu_custom_call.1} parent=1 // pred_check
      _
    $region11: #{tpu_custom_call.1} parent=1 // pred_check_branch
      %37 = sbr.rel (0) target = $region13
    $region12: #{tpu_custom_call.1} parent=1 // pred_region
      _
    $region13: #{tpu_custom_call.1} parent=1 // pred_fallthru
      _
    // Predicated region
    $region14: #{tpu_custom_call.1} parent=1 // pred_check
      _
    $region15: #{tpu_custom_call.1} parent=1 // pred_check_branch
      %39 = sbr.rel (0) target = $region17
    $region16: #{tpu_custom_call.1} parent=1 // pred_region
      _
    $region17: #{tpu_custom_call.1} parent=1 // pred_fallthru
      _
    // Predicated region
    $region18: #{tpu_custom_call.1} parent=1 // pred_check
      _
    $region19: #{tpu_custom_call.1} parent=1 // pred_check_branch
      %41 = sbr.rel (0) target = $region21
    $region20: #{tpu_custom_call.1} parent=1 // pred_region
      %42 = dma.done [#allocation3], 32768
    $region21: #{tpu_custom_call.1} parent=1 // pred_fallthru
      _
    // Predicated region
    $region22: #{tpu_custom_call.1} parent=1 // pred_check
      _
    $region23: #{tpu_custom_call.1} parent=1 // pred_check_branch
      %44 = sbr.rel (0) target = $region25
    $region24: #{tpu_custom_call.1} parent=1 // pred_region
      %45 = dma.done [#allocation6], 448
    $region25: #{tpu_custom_call.1} parent=1 // pred_fallthru
      _
    %v47 = vld [vmem:[#allocation2] sm:$0xff]
    %v48 = vld [vmem:[#allocation2 + $0x8] sm:$0xff]
    %v49 = vld [vmem:[#allocation2 + $0x10] sm:$0xff]
    %v50 = vld [vmem:[#allocation2 + $0x18] sm:$0xff]
    %v51 = vld [vmem:[#allocation2 + $0x20] sm:$0xff]
    %v52 = vld [vmem:[#allocation2 + $0x28] sm:$0xff]
    %v53 = vld [vmem:[#allocation2 + $0x30] sm:$0xff]
    %v54 = vld [vmem:[#allocation2 + $0x38] sm:$0xff]
    %v55 = vld [vmem:[#allocation2 + $0x40] sm:$0xff]
    %v56 = vld [vmem:[#allocation2 + $0x48] sm:$0xff]
    %v57 = vld [vmem:[#allocation2 + $0x50] sm:$0xff]
    %v58 = vld [vmem:[#allocation2 + $0x58] sm:$0xff]
    %v59 = vld [vmem:[#allocation2 + $0x60] sm:$0xff]
    %v60 = vld [vmem:[#allocation2 + $0x68] sm:$0xff]
    %v61 = vld [vmem:[#allocation2 + $0x70] sm:$0xff]
    %v62 = vld [vmem:[#allocation2 + $0x78] sm:$0xff]
    %v63 = vld [vmem:[#allocation2 + $0x80] sm:$0xff]
    %v64 = vld [vmem:[#allocation2 + $0x88] sm:$0xff]
    %v65 = vld [vmem:[#allocation2 + $0x90] sm:$0xff]
    %v66 = vld [vmem:[#allocation2 + $0x98] sm:$0xff]
    %v67 = vld [vmem:[#allocation2 + $0xa0] sm:$0xff]
    %v68 = vld [vmem:[#allocation2 + $0xa8] sm:$0xff]
    %v69 = vld [vmem:[#allocation2 + $0xb0] sm:$0xff]
    %v70 = vld [vmem:[#allocation2 + $0xb8] sm:$0xff]
    %v71 = vld [vmem:[#allocation2 + $0xc0] sm:$0xff]
    %v72 = vld [vmem:[#allocation2 + $0xc8] sm:$0xff]
    %v73 = vld [vmem:[#allocation2 + $0xd0] sm:$0xff]
    %v74 = vld [vmem:[#allocation2 + $0xd8] sm:$0xff]
    %v75 = vld [vmem:[#allocation2 + $0xe0] sm:$0xff]
    %v76 = vld [vmem:[#allocation2 + $0xe8] sm:$0xff]
    %v77 = vld [vmem:[#allocation2 + $0xf0] sm:$0xff]
    %v78 = vld [vmem:[#allocation2 + $0xf8] sm:$0xff]
    %v79 = vld [vmem:[#allocation2 + $0x100] sm:$0xff]
    %v80 = vld [vmem:[#allocation2 + $0x108] sm:$0xff]
    %v81 = vld [vmem:[#allocation2 + $0x110] sm:$0xff]
    %v82 = vld [vmem:[#allocation2 + $0x118] sm:$0xff]
    %v83 = vld [vmem:[#allocation2 + $0x120] sm:$0xff]
    %v84 = vld [vmem:[#allocation2 + $0x128] sm:$0xff]
    %v85 = vld [vmem:[#allocation2 + $0x130] sm:$0xff]
    %v86 = vld [vmem:[#allocation2 + $0x138] sm:$0xff]
    %v87 = vld [vmem:[#allocation2 + $0x140] sm:$0xff]
    %v88 = vld [vmem:[#allocation2 + $0x148] sm:$0xff]
    %v89 = vld [vmem:[#allocation2 + $0x150] sm:$0xff]
    %v90 = vld [vmem:[#allocation2 + $0x158] sm:$0xff]
    %v91 = vld [vmem:[#allocation2 + $0x160] sm:$0xff]
    %v92 = vld [vmem:[#allocation2 + $0x168] sm:$0xff]
    %v93 = vld [vmem:[#allocation2 + $0x170] sm:$0xff]
    %v94 = vld [vmem:[#allocation2 + $0x178] sm:$0xff]
    %v95 = vld [vmem:[#allocation2 + $0x180] sm:$0xff]
    %v96 = vld [vmem:[#allocation2 + $0x188] sm:$0xff]
    %v97 = vld [vmem:[#allocation2 + $0x190] sm:$0xff]
    %v98 = vld [vmem:[#allocation2 + $0x198] sm:$0xff]
    %v99 = vld [vmem:[#allocation2 + $0x1a0] sm:$0xff]
    %v100 = vld [vmem:[#allocation2 + $0x1a8] sm:$0xff]
    %v101 = vld [vmem:[#allocation2 + $0x1b0] sm:$0xff]
    %v102 = vld [vmem:[#allocation2 + $0x1b8] sm:$0xff]
    %v103 = vld [vmem:[#allocation2 + $0x1c0] sm:$0xff]
    %v104 = vld [vmem:[#allocation2 + $0x1c8] sm:$0xff]
    %v105 = vld [vmem:[#allocation2 + $0x1d0] sm:$0xff]
    %v106 = vld [vmem:[#allocation2 + $0x1d8] sm:$0xff]
    %v107 = vld [vmem:[#allocation2 + $0x1e0] sm:$0xff]
    %v108 = vld [vmem:[#allocation2 + $0x1e8] sm:$0xff]
    %v109 = vld [vmem:[#allocation2 + $0x1f0] sm:$0xff]
    %v110 = vld [vmem:[#allocation2 + $0x1f8] sm:$0xff]
    %v111 = vld [vmem:[#allocation2 + $0x200] sm:$0xff]
    %v112 = vld [vmem:[#allocation2 + $0x208] sm:$0xff]
    %v113 = vld [vmem:[#allocation2 + $0x210] sm:$0xff]
    %v114 = vld [vmem:[#allocation2 + $0x218] sm:$0xff]
    %v115 = vld [vmem:[#allocation2 + $0x220] sm:$0xff]
    %v116 = vld [vmem:[#allocation2 + $0x228] sm:$0xff]
    %v117 = vld [vmem:[#allocation2 + $0x230] sm:$0xff]
    %v118 = vld [vmem:[#allocation2 + $0x238] sm:$0xff]
    %v119 = vld [vmem:[#allocation2 + $0x240] sm:$0xff]
    %v120 = vld [vmem:[#allocation2 + $0x248] sm:$0xff]
    %v121 = vld [vmem:[#allocation2 + $0x250] sm:$0xff]
    %v122 = vld [vmem:[#allocation2 + $0x258] sm:$0xff]
    %v123 = vld [vmem:[#allocation2 + $0x260] sm:$0xff]
    %v124 = vld [vmem:[#allocation2 + $0x268] sm:$0xff]
    %v125 = vld [vmem:[#allocation2 + $0x270] sm:$0xff]
    %v126 = vld [vmem:[#allocation2 + $0x278] sm:$0xff]
    %v127 = vld [vmem:[#allocation2 + $0x280] sm:$0xff]
    %v128 = vld [vmem:[#allocation2 + $0x288] sm:$0xff]
    %v129 = vld [vmem:[#allocation2 + $0x290] sm:$0xff]
    %v130 = vld [vmem:[#allocation2 + $0x298] sm:$0xff]
    %v131 = vld [vmem:[#allocation2 + $0x2a0] sm:$0xff]
    %v132 = vld [vmem:[#allocation2 + $0x2a8] sm:$0xff]
    %v133 = vld [vmem:[#allocation2 + $0x2b0] sm:$0xff]
    %v134 = vld [vmem:[#allocation2 + $0x2b8] sm:$0xff]
    %v135 = vld [vmem:[#allocation2 + $0x2c0] sm:$0xff]
    %v136 = vld [vmem:[#allocation2 + $0x2c8] sm:$0xff]
    %v137 = vld [vmem:[#allocation2 + $0x2d0] sm:$0xff]
    %v138 = vld [vmem:[#allocation2 + $0x2d8] sm:$0xff]
    %v139 = vld [vmem:[#allocation2 + $0x2e0] sm:$0xff]
    %v140 = vld [vmem:[#allocation2 + $0x2e8] sm:$0xff]
    %v141 = vld [vmem:[#allocation2 + $0x2f0] sm:$0xff]
    %v142 = vld [vmem:[#allocation2 + $0x2f8] sm:$0xff]
    %v143 = vld [vmem:[#allocation2 + $0x300] sm:$0xff]
    %v144 = vld [vmem:[#allocation2 + $0x308] sm:$0xff]
    %v145 = vld [vmem:[#allocation2 + $0x310] sm:$0xff]
    %v146 = vld [vmem:[#allocation2 + $0x318] sm:$0xff]
    %v147 = vld [vmem:[#allocation2 + $0x320] sm:$0xff]
    %v148 = vld [vmem:[#allocation2 + $0x328] sm:$0xff]
    %v149 = vld [vmem:[#allocation2 + $0x330] sm:$0xff]
    %v150 = vld [vmem:[#allocation2 + $0x338] sm:$0xff]
    %v151 = vld [vmem:[#allocation2 + $0x340] sm:$0xff]
    %v152 = vld [vmem:[#allocation2 + $0x348] sm:$0xff]
    %v153 = vld [vmem:[#allocation2 + $0x350] sm:$0xff]
    %v154 = vld [vmem:[#allocation2 + $0x358] sm:$0xff]
    %v155 = vld [vmem:[#allocation2 + $0x360] sm:$0xff]
    %v156 = vld [vmem:[#allocation2 + $0x368] sm:$0xff]
    %v157 = vld [vmem:[#allocation2 + $0x370] sm:$0xff]
    %v158 = vld [vmem:[#allocation2 + $0x378] sm:$0xff]
    %v159 = vld [vmem:[#allocation2 + $0x380] sm:$0xff]
    %v160 = vld [vmem:[#allocation2 + $0x388] sm:$0xff]
    %v161 = vld [vmem:[#allocation2 + $0x390] sm:$0xff]
    %v162 = vld [vmem:[#allocation2 + $0x398] sm:$0xff]
    %v163 = vld [vmem:[#allocation2 + $0x3a0] sm:$0xff]
    %v164 = vld [vmem:[#allocation2 + $0x3a8] sm:$0xff]
    %v165 = vld [vmem:[#allocation2 + $0x3b0] sm:$0xff]
    %v166 = vld [vmem:[#allocation2 + $0x3b8] sm:$0xff]
    %v167 = vld [vmem:[#allocation2 + $0x3c0] sm:$0xff]
    %v168 = vld [vmem:[#allocation2 + $0x3c8] sm:$0xff]
    %v169 = vld [vmem:[#allocation2 + $0x3d0] sm:$0xff]
    %v170 = vld [vmem:[#allocation2 + $0x3d8] sm:$0xff]
    %v171 = vld [vmem:[#allocation2 + $0x3e0] sm:$0xff]
    %v172 = vld [vmem:[#allocation2 + $0x3e8] sm:$0xff]
    %v173 = vld [vmem:[#allocation2 + $0x3f0] sm:$0xff]
    %v174 = vld [vmem:[#allocation2 + $0x3f8] sm:$0xff]
    %v175 = vld [vmem:[#allocation2 + $0x400] sm:$0xff]
    %v176 = vld [vmem:[#allocation2 + $0x408] sm:$0xff]
    %v177 = vld [vmem:[#allocation2 + $0x410] sm:$0xff]
    %v178 = vld [vmem:[#allocation2 + $0x418] sm:$0xff]
    %v179 = vld [vmem:[#allocation2 + $0x420] sm:$0xff]
    %v180 = vld [vmem:[#allocation2 + $0x428] sm:$0xff]
    %v181 = vld [vmem:[#allocation2 + $0x430] sm:$0xff]
    %v182 = vld [vmem:[#allocation2 + $0x438] sm:$0xff]
    %v183 = vld [vmem:[#allocation2 + $0x440] sm:$0xff]
    %v184 = vld [vmem:[#allocation2 + $0x448] sm:$0xff]
    %v185 = vld [vmem:[#allocation2 + $0x450] sm:$0xff]
    %v186 = vld [vmem:[#allocation2 + $0x458] sm:$0xff]
    %v187 = vld [vmem:[#allocation2 + $0x460] sm:$0xff]
    %v188 = vld [vmem:[#allocation2 + $0x468] sm:$0xff]
    %v189 = vld [vmem:[#allocation2 + $0x470] sm:$0xff]
    %v190 = vld [vmem:[#allocation2 + $0x478] sm:$0xff]
    %v191 = vld [vmem:[#allocation2 + $0x480] sm:$0xff]
    %v192 = vld [vmem:[#allocation2 + $0x488] sm:$0xff]
    %v193 = vld [vmem:[#allocation2 + $0x490] sm:$0xff]
    %v194 = vld [vmem:[#allocation2 + $0x498] sm:$0xff]
    %v195 = vld [vmem:[#allocation2 + $0x4a0] sm:$0xff]
    %v196 = vld [vmem:[#allocation2 + $0x4a8] sm:$0xff]
    %v197 = vld [vmem:[#allocation2 + $0x4b0] sm:$0xff]
    %v198 = vld [vmem:[#allocation2 + $0x4b8] sm:$0xff]
    %v199 = vld [vmem:[#allocation2 + $0x4c0] sm:$0xff]
    %v200 = vld [vmem:[#allocation2 + $0x4c8] sm:$0xff]
    %v201 = vld [vmem:[#allocation2 + $0x4d0] sm:$0xff]
    %v202 = vld [vmem:[#allocation2 + $0x4d8] sm:$0xff]
    %v203 = vld [vmem:[#allocation2 + $0x4e0] sm:$0xff]
    %v204 = vld [vmem:[#allocation2 + $0x4e8] sm:$0xff]
    %v205 = vld [vmem:[#allocation2 + $0x4f0] sm:$0xff]
    %v206 = vld [vmem:[#allocation2 + $0x4f8] sm:$0xff]
    %v207 = vld [vmem:[#allocation2 + $0x500] sm:$0xff]
    %v208 = vld [vmem:[#allocation2 + $0x508] sm:$0xff]
    %v209 = vld [vmem:[#allocation2 + $0x510] sm:$0xff]
    %v210 = vld [vmem:[#allocation2 + $0x518] sm:$0xff]
    %v211 = vld [vmem:[#allocation2 + $0x520] sm:$0xff]
    %v212 = vld [vmem:[#allocation2 + $0x528] sm:$0xff]
    %v213 = vld [vmem:[#allocation2 + $0x530] sm:$0xff]
    %v214 = vld [vmem:[#allocation2 + $0x538] sm:$0xff]
    %v215 = vld [vmem:[#allocation2 + $0x540] sm:$0xff]
    %v216 = vld [vmem:[#allocation2 + $0x548] sm:$0xff]
    %v217 = vld [vmem:[#allocation2 + $0x550] sm:$0xff]
    %v218 = vld [vmem:[#allocation2 + $0x558] sm:$0xff]
    %v219 = vld [vmem:[#allocation2 + $0x560] sm:$0xff]
    %v220 = vld [vmem:[#allocation2 + $0x568] sm:$0xff]
    %v221 = vld [vmem:[#allocation2 + $0x570] sm:$0xff]
    %v222 = vld [vmem:[#allocation2 + $0x578] sm:$0xff]
    %v223 = vld [vmem:[#allocation2 + $0x580] sm:$0xff]
    %v224 = vld [vmem:[#allocation2 + $0x588] sm:$0xff]
    %v225 = vld [vmem:[#allocation2 + $0x590] sm:$0xff]
    %v226 = vld [vmem:[#allocation2 + $0x598] sm:$0xff]
    %v227 = vld [vmem:[#allocation2 + $0x5a0] sm:$0xff]
    %v228 = vld [vmem:[#allocation2 + $0x5a8] sm:$0xff]
    %v229 = vld [vmem:[#allocation2 + $0x5b0] sm:$0xff]
    %v230 = vld [vmem:[#allocation2 + $0x5b8] sm:$0xff]
    %v231 = vld [vmem:[#allocation2 + $0x5c0] sm:$0xff]
    %v232 = vld [vmem:[#allocation2 + $0x5c8] sm:$0xff]
    %v233 = vld [vmem:[#allocation2 + $0x5d0] sm:$0xff]
    %v234 = vld [vmem:[#allocation2 + $0x5d8] sm:$0xff]
    %v235 = vld [vmem:[#allocation2 + $0x5e0] sm:$0xff]
    %v236 = vld [vmem:[#allocation2 + $0x5e8] sm:$0xff]
    %v237 = vld [vmem:[#allocation2 + $0x5f0] sm:$0xff]
    %v238 = vld [vmem:[#allocation2 + $0x5f8] sm:$0xff]
    %v239 = vld [vmem:[#allocation2 + $0x600] sm:$0xff]
    %v240 = vld [vmem:[#allocation2 + $0x608] sm:$0xff]
    %v241 = vld [vmem:[#allocation2 + $0x610] sm:$0xff]
    %v242 = vld [vmem:[#allocation2 + $0x618] sm:$0xff]
    %v243 = vld [vmem:[#allocation2 + $0x620] sm:$0xff]
    %v244 = vld [vmem:[#allocation2 + $0x628] sm:$0xff]
    %v245 = vld [vmem:[#allocation2 + $0x630] sm:$0xff]
    %v246 = vld [vmem:[#allocation2 + $0x638] sm:$0xff]
    %v247 = vld [vmem:[#allocation2 + $0x640] sm:$0xff]
    %v248 = vld [vmem:[#allocation2 + $0x648] sm:$0xff]
    %v249 = vld [vmem:[#allocation2 + $0x650] sm:$0xff]
    %v250 = vld [vmem:[#allocation2 + $0x658] sm:$0xff]
    %v251 = vld [vmem:[#allocation2 + $0x660] sm:$0xff]
    %v252 = vld [vmem:[#allocation2 + $0x668] sm:$0xff]
    %v253 = vld [vmem:[#allocation2 + $0x670] sm:$0xff]
    %v254 = vld [vmem:[#allocation2 + $0x678] sm:$0xff]
    %v255 = vld [vmem:[#allocation2 + $0x680] sm:$0xff]
    %v256 = vld [vmem:[#allocation2 + $0x688] sm:$0xff]
    %v257 = vld [vmem:[#allocation2 + $0x690] sm:$0xff]
    %v258 = vld [vmem:[#allocation2 + $0x698] sm:$0xff]
    %v259 = vld [vmem:[#allocation2 + $0x6a0] sm:$0xff]
    %v260 = vld [vmem:[#allocation2 + $0x6a8] sm:$0xff]
    %v261 = vld [vmem:[#allocation2 + $0x6b0] sm:$0xff]
    %v262 = vld [vmem:[#allocation2 + $0x6b8] sm:$0xff]
    %v263 = vld [vmem:[#allocation2 + $0x6c0] sm:$0xff]
    %v264 = vld [vmem:[#allocation2 + $0x6c8] sm:$0xff]
    %v265 = vld [vmem:[#allocation2 + $0x6d0] sm:$0xff]
    %v266 = vld [vmem:[#allocation2 + $0x6d8] sm:$0xff]
    %v267 = vld [vmem:[#allocation2 + $0x6e0] sm:$0xff]
    %v268 = vld [vmem:[#allocation2 + $0x6e8] sm:$0xff]
    %v269 = vld [vmem:[#allocation2 + $0x6f0] sm:$0xff]
    %v270 = vld [vmem:[#allocation2 + $0x6f8] sm:$0xff]
    %v271 = vld [vmem:[#allocation2 + $0x700] sm:$0xff]
    %v272 = vld [vmem:[#allocation2 + $0x708] sm:$0xff]
    %v273 = vld [vmem:[#allocation2 + $0x710] sm:$0xff]
    %v274 = vld [vmem:[#allocation2 + $0x718] sm:$0xff]
    %v275 = vld [vmem:[#allocation2 + $0x720] sm:$0xff]
    %v276 = vld [vmem:[#allocation2 + $0x728] sm:$0xff]
    %v277 = vld [vmem:[#allocation2 + $0x730] sm:$0xff]
    %v278 = vld [vmem:[#allocation2 + $0x738] sm:$0xff]
    %v279 = vld [vmem:[#allocation2 + $0x740] sm:$0xff]
    %v280 = vld [vmem:[#allocation2 + $0x748] sm:$0xff]
    %v281 = vld [vmem:[#allocation2 + $0x750] sm:$0xff]
    %v282 = vld [vmem:[#allocation2 + $0x758] sm:$0xff]
    %v283 = vld [vmem:[#allocation2 + $0x760] sm:$0xff]
    %v284 = vld [vmem:[#allocation2 + $0x768] sm:$0xff]
    %v285 = vld [vmem:[#allocation2 + $0x770] sm:$0xff]
    %v286 = vld [vmem:[#allocation2 + $0x778] sm:$0xff]
    %v287 = vld [vmem:[#allocation2 + $0x780] sm:$0xff]
    %v288 = vld [vmem:[#allocation2 + $0x788] sm:$0xff]
    %v289 = vld [vmem:[#allocation2 + $0x790] sm:$0xff]
    %v290 = vld [vmem:[#allocation2 + $0x798] sm:$0xff]
    %v291 = vld [vmem:[#allocation2 + $0x7a0] sm:$0xff]
    %v292 = vld [vmem:[#allocation2 + $0x7a8] sm:$0xff]
    %v293 = vld [vmem:[#allocation2 + $0x7b0] sm:$0xff]
    %v294 = vld [vmem:[#allocation2 + $0x7b8] sm:$0xff]
    %v295 = vld [vmem:[#allocation2 + $0x7c0] sm:$0xff]
    %v296 = vld [vmem:[#allocation2 + $0x7c8] sm:$0xff]
    %v297 = vld [vmem:[#allocation2 + $0x7d0] sm:$0xff]
    %v298 = vld [vmem:[#allocation2 + $0x7d8] sm:$0xff]
    %v299 = vld [vmem:[#allocation2 + $0x7e0] sm:$0xff]
    %v300 = vld [vmem:[#allocation2 + $0x7e8] sm:$0xff]
    %v301 = vld [vmem:[#allocation2 + $0x7f0] sm:$0xff]
    %v302 = vld [vmem:[#allocation2 + $0x7f8] sm:$0xff]
    %v303 = vpack.c.bf16 %v48, %v47
    %v304 = vpack.c.bf16 %v50, %v49
    %v305 = vpack.c.bf16 %v52, %v51
    %v306 = vpack.c.bf16 %v54, %v53
    %v307 = vpack.c.bf16 %v56, %v55
    %v308 = vpack.c.bf16 %v58, %v57
    %v309 = vpack.c.bf16 %v60, %v59
    %v310 = vpack.c.bf16 %v62, %v61
    %v311 = vpack.c.bf16 %v64, %v63
    %v312 = vpack.c.bf16 %v66, %v65
    %v313 = vpack.c.bf16 %v68, %v67
    %v314 = vpack.c.bf16 %v70, %v69
    %v315 = vpack.c.bf16 %v72, %v71
    %v316 = vpack.c.bf16 %v74, %v73
    %v317 = vpack.c.bf16 %v76, %v75
    %v318 = vpack.c.bf16 %v78, %v77
    %v319 = vpack.c.bf16 %v80, %v79
    %v320 = vpack.c.bf16 %v82, %v81
    %v321 = vpack.c.bf16 %v84, %v83
    %v322 = vpack.c.bf16 %v86, %v85
    %v323 = vpack.c.bf16 %v88, %v87
    %v324 = vpack.c.bf16 %v90, %v89
    %v325 = vpack.c.bf16 %v92, %v91
    %v326 = vpack.c.bf16 %v94, %v93
    %v327 = vpack.c.bf16 %v96, %v95
    %v328 = vpack.c.bf16 %v98, %v97
    %v329 = vpack.c.bf16 %v100, %v99
    %v330 = vpack.c.bf16 %v102, %v101
    %v331 = vpack.c.bf16 %v104, %v103
    %v332 = vpack.c.bf16 %v106, %v105
    %v333 = vpack.c.bf16 %v108, %v107
    %v334 = vpack.c.bf16 %v110, %v109
    %v335 = vpack.c.bf16 %v112, %v111
    %v336 = vpack.c.bf16 %v114, %v113
    %v337 = vpack.c.bf16 %v116, %v115
    %v338 = vpack.c.bf16 %v118, %v117
    %v339 = vpack.c.bf16 %v120, %v119
    %v340 = vpack.c.bf16 %v122, %v121
    %v341 = vpack.c.bf16 %v124, %v123
    %v342 = vpack.c.bf16 %v126, %v125
    %v343 = vpack.c.bf16 %v128, %v127
    %v344 = vpack.c.bf16 %v130, %v129
    %v345 = vpack.c.bf16 %v132, %v131
    %v346 = vpack.c.bf16 %v134, %v133
    %v347 = vpack.c.bf16 %v136, %v135
    %v348 = vpack.c.bf16 %v138, %v137
    %v349 = vpack.c.bf16 %v140, %v139
    %v350 = vpack.c.bf16 %v142, %v141
    %v351 = vpack.c.bf16 %v144, %v143
    %v352 = vpack.c.bf16 %v146, %v145
    %v353 = vpack.c.bf16 %v148, %v147
    %v354 = vpack.c.bf16 %v150, %v149
    %v355 = vpack.c.bf16 %v152, %v151
    %v356 = vpack.c.bf16 %v154, %v153
    %v357 = vpack.c.bf16 %v156, %v155
    %v358 = vpack.c.bf16 %v158, %v157
    %v359 = vpack.c.bf16 %v160, %v159
    %v360 = vpack.c.bf16 %v162, %v161
    %v361 = vpack.c.bf16 %v164, %v163
    %v362 = vpack.c.bf16 %v166, %v165
    %v363 = vpack.c.bf16 %v168, %v167
    %v364 = vpack.c.bf16 %v170, %v169
    %v365 = vpack.c.bf16 %v172, %v171
    %v366 = vpack.c.bf16 %v174, %v173
    %v367 = vpack.c.bf16 %v176, %v175
    %v368 = vpack.c.bf16 %v178, %v177
    %v369 = vpack.c.bf16 %v180, %v179
    %v370 = vpack.c.bf16 %v182, %v181
    %v371 = vpack.c.bf16 %v184, %v183
    %v372 = vpack.c.bf16 %v186, %v185
    %v373 = vpack.c.bf16 %v188, %v187
    %v374 = vpack.c.bf16 %v190, %v189
    %v375 = vpack.c.bf16 %v192, %v191
    %v376 = vpack.c.bf16 %v194, %v193
    %v377 = vpack.c.bf16 %v196, %v195
    %v378 = vpack.c.bf16 %v198, %v197
    %v379 = vpack.c.bf16 %v200, %v199
    %v380 = vpack.c.bf16 %v202, %v201
    %v381 = vpack.c.bf16 %v204, %v203
    %v382 = vpack.c.bf16 %v206, %v205
    %v383 = vpack.c.bf16 %v208, %v207
    %v384 = vpack.c.bf16 %v210, %v209
    %v385 = vpack.c.bf16 %v212, %v211
    %v386 = vpack.c.bf16 %v214, %v213
    %v387 = vpack.c.bf16 %v216, %v215
    %v388 = vpack.c.bf16 %v218, %v217
    %v389 = vpack.c.bf16 %v220, %v219
    %v390 = vpack.c.bf16 %v222, %v221
    %v391 = vpack.c.bf16 %v224, %v223
    %v392 = vpack.c.bf16 %v226, %v225
    %v393 = vpack.c.bf16 %v228, %v227
    %v394 = vpack.c.bf16 %v230, %v229
    %v395 = vpack.c.bf16 %v232, %v231
    %v396 = vpack.c.bf16 %v234, %v233
    %v397 = vpack.c.bf16 %v236, %v235
    %v398 = vpack.c.bf16 %v238, %v237
    %v399 = vpack.c.bf16 %v240, %v239
    %v400 = vpack.c.bf16 %v242, %v241
    %v401 = vpack.c.bf16 %v244, %v243
    %v402 = vpack.c.bf16 %v246, %v245
    %v403 = vpack.c.bf16 %v248, %v247
    %v404 = vpack.c.bf16 %v250, %v249
    %v405 = vpack.c.bf16 %v252, %v251
    %v406 = vpack.c.bf16 %v254, %v253
    %v407 = vpack.c.bf16 %v256, %v255
    %v408 = vpack.c.bf16 %v258, %v257
    %v409 = vpack.c.bf16 %v260, %v259
    %v410 = vpack.c.bf16 %v262, %v261
    %v411 = vpack.c.bf16 %v264, %v263
    %v412 = vpack.c.bf16 %v266, %v265
    %v413 = vpack.c.bf16 %v268, %v267
    %v414 = vpack.c.bf16 %v270, %v269
    %v415 = vpack.c.bf16 %v272, %v271
    %v416 = vpack.c.bf16 %v274, %v273
    %v417 = vpack.c.bf16 %v276, %v275
    %v418 = vpack.c.bf16 %v278, %v277
    %v419 = vpack.c.bf16 %v280, %v279
    %v420 = vpack.c.bf16 %v282, %v281
    %v421 = vpack.c.bf16 %v284, %v283
    %v422 = vpack.c.bf16 %v286, %v285
    %v423 = vpack.c.bf16 %v288, %v287
    %v424 = vpack.c.bf16 %v290, %v289
    %v425 = vpack.c.bf16 %v292, %v291
    %v426 = vpack.c.bf16 %v294, %v293
    %v427 = vpack.c.bf16 %v296, %v295
    %v428 = vpack.c.bf16 %v298, %v297
    %v429 = vpack.c.bf16 %v300, %v299
    %v430 = vpack.c.bf16 %v302, %v301
    %v431 = vld [vmem:[#allocation5] sm:$0xf]
    %v432 = vld [vmem:[#allocation5 + $0x4] sm:$0xf]
    %v433 = vld [vmem:[#allocation5 + $0x8] sm:$0xf]
    %v434 = vld [vmem:[#allocation5 + $0xc] sm:$0xf]
    %v435 = vld [vmem:[#allocation5 + $0x10] sm:$0xf]
    %v436 = vld [vmem:[#allocation5 + $0x14] sm:$0xf]
    %v437 = vld [vmem:[#allocation5 + $0x18] sm:$0x1]
    %v445 = vunpack.c.l.b16 %v431
    %v446 = vunpack.c.l.b16 %v432
    %v447 = vunpack.c.l.b16 %v433
    %v448 = vunpack.c.l.b16 %v434
    %v449 = vunpack.c.l.b16 %v435
    %v450 = vunpack.c.l.b16 %v436
    %v451 = vunpack.c.l.b16 %v437
    %v452 = vpack.c.b16 %v446, %v445
    %v453 = vpack.c.b16 %v448, %v447
    %v454 = vpack.c.b16 %v450, %v449
    %v455 = vpack.c.b16 %v451, %v451
    %vm459 = vcmask 400384
    %v461 = vsel %vm459, %v303, 0
    %v464 = vsel %vm459, %v304, 0
    %v467 = vsel %vm459, %v305, 0
    %v470 = vsel %vm459, %v306, 0
    %v473 = vsel %vm459, %v307, 0
    %v476 = vsel %vm459, %v308, 0
    %v479 = vsel %vm459, %v309, 0
    %v482 = vsel %vm459, %v310, 0
    %v485 = vsel %vm459, %v311, 0
    %v488 = vsel %vm459, %v312, 0
    %v491 = vsel %vm459, %v313, 0
    %v494 = vsel %vm459, %v314, 0
    %v497 = vsel %vm459, %v315, 0
    %v500 = vsel %vm459, %v316, 0
    %v503 = vsel %vm459, %v317, 0
    %v506 = vsel %vm459, %v318, 0
    %v509 = vsel %vm459, %v319, 0
    %v512 = vsel %vm459, %v320, 0
    %v515 = vsel %vm459, %v321, 0
    %v518 = vsel %vm459, %v322, 0
    %v521 = vsel %vm459, %v323, 0
    %v524 = vsel %vm459, %v324, 0
    %v527 = vsel %vm459, %v325, 0
    %v530 = vsel %vm459, %v326, 0
    %v533 = vsel %vm459, %v327, 0
    %v536 = vsel %vm459, %v328, 0
    %v539 = vsel %vm459, %v329, 0
    %v542 = vsel %vm459, %v330, 0
    %v545 = vsel %vm459, %v331, 0
    %v548 = vsel %vm459, %v332, 0
    %v551 = vsel %vm459, %v333, 0
    %v554 = vsel %vm459, %v334, 0
    %v557 = vsel %vm459, %v335, 0
    %v560 = vsel %vm459, %v336, 0
    %v563 = vsel %vm459, %v337, 0
    %v566 = vsel %vm459, %v338, 0
    %v569 = vsel %vm459, %v339, 0
    %v572 = vsel %vm459, %v340, 0
    %v575 = vsel %vm459, %v341, 0
    %v578 = vsel %vm459, %v342, 0
    %v581 = vsel %vm459, %v343, 0
    %v584 = vsel %vm459, %v344, 0
    %v587 = vsel %vm459, %v345, 0
    %v590 = vsel %vm459, %v346, 0
    %v593 = vsel %vm459, %v347, 0
    %v596 = vsel %vm459, %v348, 0
    %v599 = vsel %vm459, %v349, 0
    %v602 = vsel %vm459, %v350, 0
    %v605 = vsel %vm459, %v351, 0
    %v608 = vsel %vm459, %v352, 0
    %v611 = vsel %vm459, %v353, 0
    %v614 = vsel %vm459, %v354, 0
    %v617 = vsel %vm459, %v355, 0
    %v620 = vsel %vm459, %v356, 0
    %v623 = vsel %vm459, %v357, 0
    %v626 = vsel %vm459, %v358, 0
    %v629 = vsel %vm459, %v359, 0
    %v632 = vsel %vm459, %v360, 0
    %v635 = vsel %vm459, %v361, 0
    %v638 = vsel %vm459, %v362, 0
    %v641 = vsel %vm459, %v363, 0
    %v644 = vsel %vm459, %v364, 0
    %v647 = vsel %vm459, %v365, 0
    %v650 = vsel %vm459, %v366, 0
    %v653 = vsel %vm459, %v367, 0
    %v656 = vsel %vm459, %v368, 0
    %v659 = vsel %vm459, %v369, 0
    %v662 = vsel %vm459, %v370, 0
    %v665 = vsel %vm459, %v371, 0
    %v668 = vsel %vm459, %v372, 0
    %v671 = vsel %vm459, %v373, 0
    %v674 = vsel %vm459, %v374, 0
    %v677 = vsel %vm459, %v375, 0
    %v680 = vsel %vm459, %v376, 0
    %v683 = vsel %vm459, %v377, 0
    %v686 = vsel %vm459, %v378, 0
    %v689 = vsel %vm459, %v379, 0
    %v692 = vsel %vm459, %v380, 0
    %v695 = vsel %vm459, %v381, 0
    %v698 = vsel %vm459, %v382, 0
    %v701 = vsel %vm459, %v383, 0
    %v704 = vsel %vm459, %v384, 0
    %v707 = vsel %vm459, %v385, 0
    %v710 = vsel %vm459, %v386, 0
    %v713 = vsel %vm459, %v387, 0
    %v716 = vsel %vm459, %v388, 0
    %v719 = vsel %vm459, %v389, 0
    %v722 = vsel %vm459, %v390, 0
    %v725 = vsel %vm459, %v391, 0
    %v728 = vsel %vm459, %v392, 0
    %v731 = vsel %vm459, %v393, 0
    %v734 = vsel %vm459, %v394, 0
    %v737 = vsel %vm459, %v395, 0
    %v740 = vsel %vm459, %v396, 0
    %v743 = vsel %vm459, %v397, 0
    %v746 = vsel %vm459, %v398, 0
    %v749 = vsel %vm459, %v399, 0
    %v752 = vsel %vm459, %v400, 0
    %v755 = vsel %vm459, %v401, 0
    %v758 = vsel %vm459, %v402, 0
    %v761 = vsel %vm459, %v403, 0
    %v764 = vsel %vm459, %v404, 0
    %v767 = vsel %vm459, %v405, 0
    %v770 = vsel %vm459, %v406, 0
    %v773 = vsel %vm459, %v407, 0
    %v776 = vsel %vm459, %v408, 0
    %v779 = vsel %vm459, %v409, 0
    %v782 = vsel %vm459, %v410, 0
    %v785 = vsel %vm459, %v411, 0
    %v788 = vsel %vm459, %v412, 0
    %v791 = vsel %vm459, %v413, 0
    %v794 = vsel %vm459, %v414, 0
    %v797 = vsel %vm459, %v415, 0
    %v800 = vsel %vm459, %v416, 0
    %v803 = vsel %vm459, %v417, 0
    %v806 = vsel %vm459, %v418, 0
    %v809 = vsel %vm459, %v419, 0
    %v812 = vsel %vm459, %v420, 0
    %v815 = vsel %vm459, %v421, 0
    %v818 = vsel %vm459, %v422, 0
    %v821 = vsel %vm459, %v423, 0
    %v824 = vsel %vm459, %v424, 0
    %v827 = vsel %vm459, %v425, 0
    %v830 = vsel %vm459, %v426, 0
    %v833 = vsel %vm459, %v427, 0
    %v836 = vsel %vm459, %v428, 0
    %v839 = vsel %vm459, %v429, 0
    %v842 = vsel %vm459, %v430, 0
    %vm844 = vcmask 1040384
    %v845 = vsel 0, 4294967295, 65535
    %v846 = vsel %vm844, %v845, 0
    %v848 = vand.u32 %v455, %v846
    %850 = vmatprep.subr.bf16.mxu0 0
    %851 = vmatpush1.bf16.msra.mxu0 %v452
    %852 = vmatprep.subr.bf16.mxu0 0
    %853 = vmatpush1.bf16.msra.mxu0 %v453
    %854 = vmatprep.subr.bf16.mxu0 0
    %855 = vmatpush1.bf16.msra.mxu0 %v454
    %856 = vmatprep.subr.bf16.mxu0 0
    %857 = vmatpush1.bf16.msra.mxu0 %v848
    %858 = vmatprep.subr.bf16.mxu0 0
    %859 = vmatpush1.bf16.msra.mxu0 0
    %860 = vmatprep.subr.bf16.mxu0 0
    %861 = vmatpush1.bf16.msra.mxu0 0
    %862 = vmatprep.subr.bf16.mxu0 0
    %863 = vmatpush1.bf16.msra.mxu0 0
    %864 = vmatprep.subr.bf16.mxu0 0
    %865 = vmatpush1.bf16.msra.mxu0 0
    %866 = vmatprep.subr.bf16.mxu0 0
    %867 = vmatpush1.bf16.msra.mxu0 0
    %868 = vmatprep.subr.bf16.mxu0 0
    %869 = vmatpush1.bf16.msra.mxu0 0
    %870 = vmatprep.subr.bf16.mxu0 0
    %871 = vmatpush1.bf16.msra.mxu0 0
    %872 = vmatprep.subr.bf16.mxu0 0
    %873 = vmatpush1.bf16.msra.mxu0 0
    %874 = vmatprep.subr.bf16.mxu0 0
    %875 = vmatpush1.bf16.msra.mxu0 0
    %876 = vmatprep.subr.bf16.mxu0 0
    %877 = vmatpush1.bf16.msra.mxu0 0
    %878 = vmatprep.subr.bf16.mxu0 0
    %879 = vmatpush1.bf16.msra.mxu0 0
    %880 = vmatprep.subr.bf16.mxu0 0
    %881 = vmatpush1.bf16.msra.mxu0 0
    %882 = vmatprep.mubr.bf16.mxu0 0
    %883 = vmatmul.mubr.bf16.gmra.mrb[0].mxu0 %v461
    %v884 = vpop.f32.mrb[0].mxu0
    %v885 = vadd.f32 0.0, %v884
    %v886 = vpop.f32.mrb[0].mxu0
    %v887 = vpop.f32.mrb[0].mxu0
    %v888 = vadd.f32 0.0, %v887
    %v889 = vpop.f32.mrb[0].mxu0
    %890 = vmatprep.mubr.bf16.mxu0 0
    %891 = vmatmul.mubr.bf16.gmra.mrb[0].mxu0 %v464
    %v892 = vpop.f32.mrb[0].mxu0
    %v893 = vadd.f32 0.0, %v892
    %v894 = vpop.f32.mrb[0].mxu0
    %v895 = vpop.f32.mrb[0].mxu0
    %v896 = vadd.f32 0.0, %v895
    %v897 = vpop.f32.mrb[0].mxu0
    %898 = vmatprep.mubr.bf16.mxu0 0
    %899 = vmatmul.mubr.bf16.gmra.mrb[0].mxu0 %v467
    %v900 = vpop.f32.mrb[0].mxu0
    %v901 = vadd.f32 0.0, %v900
    %v902 = vpop.f32.mrb[0].mxu0
    %v903 = vpop.f32.mrb[0].mxu0
    %v904 = vadd.f32 0.0, %v903
    %v905 = vpop.f32.mrb[0].mxu0
    %906 = vmatprep.mubr.bf16.mxu0 0
    %907 = vmatmul.mubr.bf16.gmra.mrb[0].mxu0 %v470
    %v908 = vpop.f32.mrb[0].mxu0
    %v909 = vadd.f32 0.0, %v908
    %v910 = vpop.f32.mrb[0].mxu0
    %v911 = vpop.f32.mrb[0].mxu0
    %v912 = vadd.f32 0.0, %v911
    %v913 = vpop.f32.mrb[0].mxu0
    %914 = vmatprep.mubr.bf16.mxu0 0
    %915 = vmatmul.mubr.bf16.gmra.mrb[0].mxu0 %v473
    %v916 = vpop.f32.mrb[0].mxu0
    %v917 = vadd.f32 0.0, %v916
    %v918 = vpop.f32.mrb[0].mxu0
    %v919 = vpop.f32.mrb[0].mxu0
    %v920 = vadd.f32 0.0, %v919
    %v921 = vpop.f32.mrb[0].mxu0
    %922 = vmatprep.mubr.bf16.mxu0 0
    %923 = vmatmul.mubr.bf16.gmra.mrb[0].mxu0 %v476
    %v924 = vpop.f32.mrb[0].mxu0
    %v925 = vadd.f32 0.0, %v924
    %v926 = vpop.f32.mrb[0].mxu0
    %v927 = vpop.f32.mrb[0].mxu0
    %v928 = vadd.f32 0.0, %v927
    %v929 = vpop.f32.mrb[0].mxu0
    %930 = vmatprep.mubr.bf16.mxu0 0
    %931 = vmatmul.mubr.bf16.gmra.mrb[0].mxu0 %v479
    %v932 = vpop.f32.mrb[0].mxu0
    %v933 = vadd.f32 0.0, %v932
    %v934 = vpop.f32.mrb[0].mxu0
    %v935 = vpop.f32.mrb[0].mxu0
    %v936 = vadd.f32 0.0, %v935
    %v937 = vpop.f32.mrb[0].mxu0
    %938 = vmatprep.mubr.bf16.mxu0 0
    %939 = vmatmul.mubr.bf16.gmra.mrb[0].mxu0 %v482
    %v940 = vpop.f32.mrb[0].mxu0
    %v941 = vadd.f32 0.0, %v940
    %v942 = vpop.f32.mrb[0].mxu0
    %v943 = vpop.f32.mrb[0].mxu0
    %v944 = vadd.f32 0.0, %v943
    %v945 = vpop.f32.mrb[0].mxu0
    %946 = vmatprep.mubr.bf16.mxu0 0
    %947 = vmatmul.mubr.bf16.gmra.mrb[0].mxu0 %v485
    %v948 = vpop.f32.mrb[0].mxu0
    %v949 = vadd.f32 0.0, %v948
    %v950 = vpop.f32.mrb[0].mxu0
    %v951 = vpop.f32.mrb[0].mxu0
    %v952 = vadd.f32 0.0, %v951
    %v953 = vpop.f32.mrb[0].mxu0
    %954 = vmatprep.mubr.bf16.mxu0 0
    %955 = vmatmul.mubr.bf16.gmra.mrb[0].mxu0 %v488
    %v956 = vpop.f32.mrb[0].mxu0
    %v957 = vadd.f32 0.0, %v956
    %v958 = vpop.f32.mrb[0].mxu0
    %v959 = vpop.f32.mrb[0].mxu0
    %v960 = vadd.f32 0.0, %v959
    %v961 = vpop.f32.mrb[0].mxu0
    %962 = vmatprep.mubr.bf16.mxu0 0
    %963 = vmatmul.mubr.bf16.gmra.mrb[0].mxu0 %v491
    %v964 = vpop.f32.mrb[0].mxu0
    %v965 = vadd.f32 0.0, %v964
    %v966 = vpop.f32.mrb[0].mxu0
    %v967 = vpop.f32.mrb[0].mxu0
    %v968 = vadd.f32 0.0, %v967
    %v969 = vpop.f32.mrb[0].mxu0
    %970 = vmatprep.mubr.bf16.mxu0 0
    %971 = vmatmul.mubr.bf16.gmra.mrb[0].mxu0 %v494
    %v972 = vpop.f32.mrb[0].mxu0
    %v973 = vadd.f32 0.0, %v972
    %v974 = vpop.f32.mrb[0].mxu0
    %v975 = vpop.f32.mrb[0].mxu0
    %v976 = vadd.f32 0.0, %v975
    %v977 = vpop.f32.mrb[0].mxu0
    %978 = vmatprep.mubr.bf16.mxu0 0
    %979 = vmatmul.mubr.bf16.gmra.mrb[0].mxu0 %v497
    %v980 = vpop.f32.mrb[0].mxu0
    %v981 = vadd.f32 0.0, %v980
    %v982 = vpop.f32.mrb[0].mxu0
    %v983 = vpop.f32.mrb[0].mxu0
    %v984 = vadd.f32 0.0, %v983
    %v985 = vpop.f32.mrb[0].mxu0
    %986 = vmatprep.mubr.bf16.mxu0 0
    %987 = vmatmul.mubr.bf16.gmra.mrb[0].mxu0 %v500
    %v988 = vpop.f32.mrb[0].mxu0
    %v989 = vadd.f32 0.0, %v988
    %v990 = vpop.f32.mrb[0].mxu0
    %v991 = vpop.f32.mrb[0].mxu0
    %v992 = vadd.f32 0.0, %v991
    %v993 = vpop.f32.mrb[0].mxu0
    %994 = vmatprep.mubr.bf16.mxu0 0
    %995 = vmatmul.mubr.bf16.gmra.mrb[0].mxu0 %v503
    %v996 = vpop.f32.mrb[0].mxu0
    %v997 = vadd.f32 0.0, %v996
    %v998 = vpop.f32.mrb[0].mxu0
    %v999 = vpop.f32.mrb[0].mxu0
    %v1000 = vadd.f32 0.0, %v999
    %v1001 = vpop.f32.mrb[0].mxu0
    %1002 = vmatprep.mubr.bf16.mxu0 0
    %1003 = vmatmul.mubr.bf16.gmra.mrb[0].mxu0 %v506
    %v1004 = vpop.f32.mrb[0].mxu0
    %v1005 = vadd.f32 0.0, %v1004
    %v1006 = vpop.f32.mrb[0].mxu0
    %v1007 = vpop.f32.mrb[0].mxu0
    %v1008 = vadd.f32 0.0, %v1007
    %v1009 = vpop.f32.mrb[0].mxu0
    %1010 = vmatprep.mubr.bf16.mxu0 0
    %1011 = vmatmul.mubr.bf16.gmra.mrb[0].mxu0 %v509
    %v1012 = vpop.f32.mrb[0].mxu0
    %v1013 = vadd.f32 0.0, %v1012
    %v1014 = vpop.f32.mrb[0].mxu0
    %v1015 = vpop.f32.mrb[0].mxu0
    %v1016 = vadd.f32 0.0, %v1015
    %v1017 = vpop.f32.mrb[0].mxu0
    %1018 = vmatprep.mubr.bf16.mxu0 0
    %1019 = vmatmul.mubr.bf16.gmra.mrb[0].mxu0 %v512
    %v1020 = vpop.f32.mrb[0].mxu0
    %v1021 = vadd.f32 0.0, %v1020
    %v1022 = vpop.f32.mrb[0].mxu0
    %v1023 = vpop.f32.mrb[0].mxu0
    %v1024 = vadd.f32 0.0, %v1023
    %v1025 = vpop.f32.mrb[0].mxu0
    %1026 = vmatprep.mubr.bf16.mxu0 0
    %1027 = vmatmul.mubr.bf16.gmra.mrb[0].mxu0 %v515
    %v1028 = vpop.f32.mrb[0].mxu0
    %v1029 = vadd.f32 0.0, %v1028
    %v1030 = vpop.f32.mrb[0].mxu0
    %v1031 = vpop.f32.mrb[0].mxu0
    %v1032 = vadd.f32 0.0, %v1031
    %v1033 = vpop.f32.mrb[0].mxu0
    %1034 = vmatprep.mubr.bf16.mxu0 0
    %1035 = vmatmul.mubr.bf16.gmra.mrb[0].mxu0 %v518
    %v1036 = vpop.f32.mrb[0].mxu0
    %v1037 = vadd.f32 0.0, %v1036
    %v1038 = vpop.f32.mrb[0].mxu0
    %v1039 = vpop.f32.mrb[0].mxu0
    %v1040 = vadd.f32 0.0, %v1039
    %v1041 = vpop.f32.mrb[0].mxu0
    %1042 = vmatprep.mubr.bf16.mxu0 0
    %1043 = vmatmul.mubr.bf16.gmra.mrb[0].mxu0 %v521
    %v1044 = vpop.f32.mrb[0].mxu0
    %v1045 = vadd.f32 0.0, %v1044
    %v1046 = vpop.f32.mrb[0].mxu0
    %v1047 = vpop.f32.mrb[0].mxu0
    %v1048 = vadd.f32 0.0, %v1047
    %v1049 = vpop.f32.mrb[0].mxu0
    %1050 = vmatprep.mubr.bf16.mxu0 0
    %1051 = vmatmul.mubr.bf16.gmra.mrb[0].mxu0 %v524
    %v1052 = vpop.f32.mrb[0].mxu0
    %v1053 = vadd.f32 0.0, %v1052
    %v1054 = vpop.f32.mrb[0].mxu0
    %v1055 = vpop.f32.mrb[0].mxu0
    %v1056 = vadd.f32 0.0, %v1055
    %v1057 = vpop.f32.mrb[0].mxu0
    %1058 = vmatprep.mubr.bf16.mxu0 0
    %1059 = vmatmul.mubr.bf16.gmra.mrb[0].mxu0 %v527
    %v1060 = vpop.f32.mrb[0].mxu0
    %v1061 = vadd.f32 0.0, %v1060
    %v1062 = vpop.f32.mrb[0].mxu0
    %v1063 = vpop.f32.mrb[0].mxu0
    %v1064 = vadd.f32 0.0, %v1063
    %v1065 = vpop.f32.mrb[0].mxu0
    %1066 = vmatprep.mubr.bf16.mxu0 0
    %1067 = vmatmul.mubr.bf16.gmra.mrb[0].mxu0 %v530
    %v1068 = vpop.f32.mrb[0].mxu0
    %v1069 = vadd.f32 0.0, %v1068
    %v1070 = vpop.f32.mrb[0].mxu0
    %v1071 = vpop.f32.mrb[0].mxu0
    %v1072 = vadd.f32 0.0, %v1071
    %v1073 = vpop.f32.mrb[0].mxu0
    %1074 = vmatprep.mubr.bf16.mxu0 0
    %1075 = vmatmul.mubr.bf16.gmra.mrb[0].mxu0 %v533
    %v1076 = vpop.f32.mrb[0].mxu0
    %v1077 = vadd.f32 0.0, %v1076
    %v1078 = vpop.f32.mrb[0].mxu0
    %v1079 = vpop.f32.mrb[0].mxu0
    %v1080 = vadd.f32 0.0, %v1079
    %v1081 = vpop.f32.mrb[0].mxu0
    %1082 = vmatprep.mubr.bf16.mxu0 0
    %1083 = vmatmul.mubr.bf16.gmra.mrb[0].mxu0 %v536
    %v1084 = vpop.f32.mrb[0].mxu0
    %v1085 = vadd.f32 0.0, %v1084
    %v1086 = vpop.f32.mrb[0].mxu0
    %v1087 = vpop.f32.mrb[0].mxu0
    %v1088 = vadd.f32 0.0, %v1087
    %v1089 = vpop.f32.mrb[0].mxu0
    %1090 = vmatprep.mubr.bf16.mxu0 0
    %1091 = vmatmul.mubr.bf16.gmra.mrb[0].mxu0 %v539
    %v1092 = vpop.f32.mrb[0].mxu0
    %v1093 = vadd.f32 0.0, %v1092
    %v1094 = vpop.f32.mrb[0].mxu0
    %v1095 = vpop.f32.mrb[0].mxu0
    %v1096 = vadd.f32 0.0, %v1095
    %v1097 = vpop.f32.mrb[0].mxu0
    %1098 = vmatprep.mubr.bf16.mxu0 0
    %1099 = vmatmul.mubr.bf16.gmra.mrb[0].mxu0 %v542
    %v1100 = vpop.f32.mrb[0].mxu0
    %v1101 = vadd.f32 0.0, %v1100
    %v1102 = vpop.f32.mrb[0].mxu0
    %v1103 = vpop.f32.mrb[0].mxu0
    %v1104 = vadd.f32 0.0, %v1103
    %v1105 = vpop.f32.mrb[0].mxu0
    %1106 = vmatprep.mubr.bf16.mxu0 0
    %1107 = vmatmul.mubr.bf16.gmra.mrb[0].mxu0 %v545
    %v1108 = vpop.f32.mrb[0].mxu0
    %v1109 = vadd.f32 0.0, %v1108
    %v1110 = vpop.f32.mrb[0].mxu0
    %v1111 = vpop.f32.mrb[0].mxu0
    %v1112 = vadd.f32 0.0, %v1111
    %v1113 = vpop.f32.mrb[0].mxu0
    %1114 = vmatprep.mubr.bf16.mxu0 0
    %1115 = vmatmul.mubr.bf16.gmra.mrb[0].mxu0 %v548
    %v1116 = vpop.f32.mrb[0].mxu0
    %v1117 = vadd.f32 0.0, %v1116
    %v1118 = vpop.f32.mrb[0].mxu0
    %v1119 = vpop.f32.mrb[0].mxu0
    %v1120 = vadd.f32 0.0, %v1119
    %v1121 = vpop.f32.mrb[0].mxu0
    %1122 = vmatprep.mubr.bf16.mxu0 0
    %1123 = vmatmul.mubr.bf16.gmra.mrb[0].mxu0 %v551
    %v1124 = vpop.f32.mrb[0].mxu0
    %v1125 = vadd.f32 0.0, %v1124
    %v1126 = vpop.f32.mrb[0].mxu0
    %v1127 = vpop.f32.mrb[0].mxu0
    %v1128 = vadd.f32 0.0, %v1127
    %v1129 = vpop.f32.mrb[0].mxu0
    %1130 = vmatprep.mubr.bf16.mxu0 0
    %1131 = vmatmul.mubr.bf16.gmra.mrb[0].mxu0 %v554
    %v1132 = vpop.f32.mrb[0].mxu0
    %v1133 = vadd.f32 0.0, %v1132
    %v1134 = vpop.f32.mrb[0].mxu0
    %v1135 = vpop.f32.mrb[0].mxu0
    %v1136 = vadd.f32 0.0, %v1135
    %v1137 = vpop.f32.mrb[0].mxu0
    %1138 = vmatprep.mubr.bf16.mxu0 0
    %1139 = vmatmul.mubr.bf16.gmra.mrb[0].mxu0 %v557
    %v1140 = vpop.f32.mrb[0].mxu0
    %v1141 = vadd.f32 0.0, %v1140
    %v1142 = vpop.f32.mrb[0].mxu0
    %v1143 = vpop.f32.mrb[0].mxu0
    %v1144 = vadd.f32 0.0, %v1143
    %v1145 = vpop.f32.mrb[0].mxu0
    %1146 = vmatprep.mubr.bf16.mxu0 0
    %1147 = vmatmul.mubr.bf16.gmra.mrb[0].mxu0 %v560
    %v1148 = vpop.f32.mrb[0].mxu0
    %v1149 = vadd.f32 0.0, %v1148
    %v1150 = vpop.f32.mrb[0].mxu0
    %v1151 = vpop.f32.mrb[0].mxu0
    %v1152 = vadd.f32 0.0, %v1151
    %v1153 = vpop.f32.mrb[0].mxu0
    %1154 = vmatprep.mubr.bf16.mxu0 0
    %1155 = vmatmul.mubr.bf16.gmra.mrb[0].mxu0 %v563
    %v1156 = vpop.f32.mrb[0].mxu0
    %v1157 = vadd.f32 0.0, %v1156
    %v1158 = vpop.f32.mrb[0].mxu0
    %v1159 = vpop.f32.mrb[0].mxu0
    %v1160 = vadd.f32 0.0, %v1159
    %v1161 = vpop.f32.mrb[0].mxu0
    %1162 = vmatprep.mubr.bf16.mxu0 0
    %1163 = vmatmul.mubr.bf16.gmra.mrb[0].mxu0 %v566
    %v1164 = vpop.f32.mrb[0].mxu0
    %v1165 = vadd.f32 0.0, %v1164
    %v1166 = vpop.f32.mrb[0].mxu0
    %v1167 = vpop.f32.mrb[0].mxu0
    %v1168 = vadd.f32 0.0, %v1167
    %v1169 = vpop.f32.mrb[0].mxu0
    %1170 = vmatprep.mubr.bf16.mxu0 0
    %1171 = vmatmul.mubr.bf16.gmra.mrb[0].mxu0 %v569
    %v1172 = vpop.f32.mrb[0].mxu0
    %v1173 = vadd.f32 0.0, %v1172
    %v1174 = vpop.f32.mrb[0].mxu0
    %v1175 = vpop.f32.mrb[0].mxu0
    %v1176 = vadd.f32 0.0, %v1175
    %v1177 = vpop.f32.mrb[0].mxu0
    %1178 = vmatprep.mubr.bf16.mxu0 0
    %1179 = vmatmul.mubr.bf16.gmra.mrb[0].mxu0 %v572
    %v1180 = vpop.f32.mrb[0].mxu0
    %v1181 = vadd.f32 0.0, %v1180
    %v1182 = vpop.f32.mrb[0].mxu0
    %v1183 = vpop.f32.mrb[0].mxu0
    %v1184 = vadd.f32 0.0, %v1183
    %v1185 = vpop.f32.mrb[0].mxu0
    %1186 = vmatprep.mubr.bf16.mxu0 0
    %1187 = vmatmul.mubr.bf16.gmra.mrb[0].mxu0 %v575
    %v1188 = vpop.f32.mrb[0].mxu0
    %v1189 = vadd.f32 0.0, %v1188
    %v1190 = vpop.f32.mrb[0].mxu0
    %v1191 = vpop.f32.mrb[0].mxu0
    %v1192 = vadd.f32 0.0, %v1191
    %v1193 = vpop.f32.mrb[0].mxu0
    %1194 = vmatprep.mubr.bf16.mxu0 0
    %1195 = vmatmul.mubr.bf16.gmra.mrb[0].mxu0 %v578
    %v1196 = vpop.f32.mrb[0].mxu0
    %v1197 = vadd.f32 0.0, %v1196
    %v1198 = vpop.f32.mrb[0].mxu0
    %v1199 = vpop.f32.mrb[0].mxu0
    %v1200 = vadd.f32 0.0, %v1199
    %v1201 = vpop.f32.mrb[0].mxu0
    %1202 = vmatprep.mubr.bf16.mxu0 0
    %1203 = vmatmul.mubr.bf16.gmra.mrb[0].mxu0 %v581
    %v1204 = vpop.f32.mrb[0].mxu0
    %v1205 = vadd.f32 0.0, %v1204
    %v1206 = vpop.f32.mrb[0].mxu0
    %v1207 = vpop.f32.mrb[0].mxu0
    %v1208 = vadd.f32 0.0, %v1207
    %v1209 = vpop.f32.mrb[0].mxu0
    %1210 = vmatprep.mubr.bf16.mxu0 0
    %1211 = vmatmul.mubr.bf16.gmra.mrb[0].mxu0 %v584
    %v1212 = vpop.f32.mrb[0].mxu0
    %v1213 = vadd.f32 0.0, %v1212
    %v1214 = vpop.f32.mrb[0].mxu0
    %v1215 = vpop.f32.mrb[0].mxu0
    %v1216 = vadd.f32 0.0, %v1215
    %v1217 = vpop.f32.mrb[0].mxu0
    %1218 = vmatprep.mubr.bf16.mxu0 0
    %1219 = vmatmul.mubr.bf16.gmra.mrb[0].mxu0 %v587
    %v1220 = vpop.f32.mrb[0].mxu0
    %v1221 = vadd.f32 0.0, %v1220
    %v1222 = vpop.f32.mrb[0].mxu0
    %v1223 = vpop.f32.mrb[0].mxu0
    %v1224 = vadd.f32 0.0, %v1223
    %v1225 = vpop.f32.mrb[0].mxu0
    %1226 = vmatprep.mubr.bf16.mxu0 0
    %1227 = vmatmul.mubr.bf16.gmra.mrb[0].mxu0 %v590
    %v1228 = vpop.f32.mrb[0].mxu0
    %v1229 = vadd.f32 0.0, %v1228
    %v1230 = vpop.f32.mrb[0].mxu0
    %v1231 = vpop.f32.mrb[0].mxu0
    %v1232 = vadd.f32 0.0, %v1231
    %v1233 = vpop.f32.mrb[0].mxu0
    %1234 = vmatprep.mubr.bf16.mxu0 0
    %1235 = vmatmul.mubr.bf16.gmra.mrb[0].mxu0 %v593
    %v1236 = vpop.f32.mrb[0].mxu0
    %v1237 = vadd.f32 0.0, %v1236
    %v1238 = vpop.f32.mrb[0].mxu0
    %v1239 = vpop.f32.mrb[0].mxu0
    %v1240 = vadd.f32 0.0, %v1239
    %v1241 = vpop.f32.mrb[0].mxu0
    %1242 = vmatprep.mubr.bf16.mxu0 0
    %1243 = vmatmul.mubr.bf16.gmra.mrb[0].mxu0 %v596
    %v1244 = vpop.f32.mrb[0].mxu0
    %v1245 = vadd.f32 0.0, %v1244
    %v1246 = vpop.f32.mrb[0].mxu0
    %v1247 = vpop.f32.mrb[0].mxu0
    %v1248 = vadd.f32 0.0, %v1247
    %v1249 = vpop.f32.mrb[0].mxu0
    %1250 = vmatprep.mubr.bf16.mxu0 0
    %1251 = vmatmul.mubr.bf16.gmra.mrb[0].mxu0 %v599
    %v1252 = vpop.f32.mrb[0].mxu0
    %v1253 = vadd.f32 0.0, %v1252
    %v1254 = vpop.f32.mrb[0].mxu0
    %v1255 = vpop.f32.mrb[0].mxu0
    %v1256 = vadd.f32 0.0, %v1255
    %v1257 = vpop.f32.mrb[0].mxu0
    %1258 = vmatprep.mubr.bf16.mxu0 0
    %1259 = vmatmul.mubr.bf16.gmra.mrb[0].mxu0 %v602
    %v1260 = vpop.f32.mrb[0].mxu0
    %v1261 = vadd.f32 0.0, %v1260
    %v1262 = vpop.f32.mrb[0].mxu0
    %v1263 = vpop.f32.mrb[0].mxu0
    %v1264 = vadd.f32 0.0, %v1263
    %v1265 = vpop.f32.mrb[0].mxu0
    %1266 = vmatprep.mubr.bf16.mxu0 0
    %1267 = vmatmul.mubr.bf16.gmra.mrb[0].mxu0 %v605
    %v1268 = vpop.f32.mrb[0].mxu0
    %v1269 = vadd.f32 0.0, %v1268
    %v1270 = vpop.f32.mrb[0].mxu0
    %v1271 = vpop.f32.mrb[0].mxu0
    %v1272 = vadd.f32 0.0, %v1271
    %v1273 = vpop.f32.mrb[0].mxu0
    %1274 = vmatprep.mubr.bf16.mxu0 0
    %1275 = vmatmul.mubr.bf16.gmra.mrb[0].mxu0 %v608
    %v1276 = vpop.f32.mrb[0].mxu0
    %v1277 = vadd.f32 0.0, %v1276
    %v1278 = vpop.f32.mrb[0].mxu0
    %v1279 = vpop.f32.mrb[0].mxu0
    %v1280 = vadd.f32 0.0, %v1279
    %v1281 = vpop.f32.mrb[0].mxu0
    %1282 = vmatprep.mubr.bf16.mxu0 0
    %1283 = vmatmul.mubr.bf16.gmra.mrb[0].mxu0 %v611
    %v1284 = vpop.f32.mrb[0].mxu0
    %v1285 = vadd.f32 0.0, %v1284
    %v1286 = vpop.f32.mrb[0].mxu0
    %v1287 = vpop.f32.mrb[0].mxu0
    %v1288 = vadd.f32 0.0, %v1287
    %v1289 = vpop.f32.mrb[0].mxu0
    %1290 = vmatprep.mubr.bf16.mxu0 0
    %1291 = vmatmul.mubr.bf16.gmra.mrb[0].mxu0 %v614
    %v1292 = vpop.f32.mrb[0].mxu0
    %v1293 = vadd.f32 0.0, %v1292
    %v1294 = vpop.f32.mrb[0].mxu0
    %v1295 = vpop.f32.mrb[0].mxu0
    %v1296 = vadd.f32 0.0, %v1295
    %v1297 = vpop.f32.mrb[0].mxu0
    %1298 = vmatprep.mubr.bf16.mxu0 0
    %1299 = vmatmul.mubr.bf16.gmra.mrb[0].mxu0 %v617
    %v1300 = vpop.f32.mrb[0].mxu0
    %v1301 = vadd.f32 0.0, %v1300
    %v1302 = vpop.f32.mrb[0].mxu0
    %v1303 = vpop.f32.mrb[0].mxu0
    %v1304 = vadd.f32 0.0, %v1303
    %v1305 = vpop.f32.mrb[0].mxu0
    %1306 = vmatprep.mubr.bf16.mxu0 0
    %1307 = vmatmul.mubr.bf16.gmra.mrb[0].mxu0 %v620
    %v1308 = vpop.f32.mrb[0].mxu0
    %v1309 = vadd.f32 0.0, %v1308
    %v1310 = vpop.f32.mrb[0].mxu0
    %v1311 = vpop.f32.mrb[0].mxu0
    %v1312 = vadd.f32 0.0, %v1311
    %v1313 = vpop.f32.mrb[0].mxu0
    %1314 = vmatprep.mubr.bf16.mxu0 0
    %1315 = vmatmul.mubr.bf16.gmra.mrb[0].mxu0 %v623
    %v1316 = vpop.f32.mrb[0].mxu0
    %v1317 = vadd.f32 0.0, %v1316
    %v1318 = vpop.f32.mrb[0].mxu0
    %v1319 = vpop.f32.mrb[0].mxu0
    %v1320 = vadd.f32 0.0, %v1319
    %v1321 = vpop.f32.mrb[0].mxu0
    %1322 = vmatprep.mubr.bf16.mxu0 0
    %1323 = vmatmul.mubr.bf16.gmra.mrb[0].mxu0 %v626
    %v1324 = vpop.f32.mrb[0].mxu0
    %v1325 = vadd.f32 0.0, %v1324
    %v1326 = vpop.f32.mrb[0].mxu0
    %v1327 = vpop.f32.mrb[0].mxu0
    %v1328 = vadd.f32 0.0, %v1327
    %v1329 = vpop.f32.mrb[0].mxu0
    %1330 = vmatprep.mubr.bf16.mxu0 0
    %1331 = vmatmul.mubr.bf16.gmra.mrb[0].mxu0 %v629
    %v1332 = vpop.f32.mrb[0].mxu0
    %v1333 = vadd.f32 0.0, %v1332
    %v1334 = vpop.f32.mrb[0].mxu0
    %v1335 = vpop.f32.mrb[0].mxu0
    %v1336 = vadd.f32 0.0, %v1335
    %v1337 = vpop.f32.mrb[0].mxu0
    %1338 = vmatprep.mubr.bf16.mxu0 0
    %1339 = vmatmul.mubr.bf16.gmra.mrb[0].mxu0 %v632
    %v1340 = vpop.f32.mrb[0].mxu0
    %v1341 = vadd.f32 0.0, %v1340
    %v1342 = vpop.f32.mrb[0].mxu0
    %v1343 = vpop.f32.mrb[0].mxu0
    %v1344 = vadd.f32 0.0, %v1343
    %v1345 = vpop.f32.mrb[0].mxu0
    %1346 = vmatprep.mubr.bf16.mxu0 0
    %1347 = vmatmul.mubr.bf16.gmra.mrb[0].mxu0 %v635
    %v1348 = vpop.f32.mrb[0].mxu0
    %v1349 = vadd.f32 0.0, %v1348
    %v1350 = vpop.f32.mrb[0].mxu0
    %v1351 = vpop.f32.mrb[0].mxu0
    %v1352 = vadd.f32 0.0, %v1351
    %v1353 = vpop.f32.mrb[0].mxu0
    %1354 = vmatprep.mubr.bf16.mxu0 0
    %1355 = vmatmul.mubr.bf16.gmra.mrb[0].mxu0 %v638
    %v1356 = vpop.f32.mrb[0].mxu0
    %v1357 = vadd.f32 0.0, %v1356
    %v1358 = vpop.f32.mrb[0].mxu0
    %v1359 = vpop.f32.mrb[0].mxu0
    %v1360 = vadd.f32 0.0, %v1359
    %v1361 = vpop.f32.mrb[0].mxu0
    %1362 = vmatprep.mubr.bf16.mxu0 0
    %1363 = vmatmul.mubr.bf16.gmra.mrb[0].mxu0 %v641
    %v1364 = vpop.f32.mrb[0].mxu0
    %v1365 = vadd.f32 0.0, %v1364
    %v1366 = vpop.f32.mrb[0].mxu0
    %v1367 = vpop.f32.mrb[0].mxu0
    %v1368 = vadd.f32 0.0, %v1367
    %v1369 = vpop.f32.mrb[0].mxu0
    %1370 = vmatprep.mubr.bf16.mxu0 0
    %1371 = vmatmul.mubr.bf16.gmra.mrb[0].mxu0 %v644
    %v1372 = vpop.f32.mrb[0].mxu0
    %v1373 = vadd.f32 0.0, %v1372
    %v1374 = vpop.f32.mrb[0].mxu0
    %v1375 = vpop.f32.mrb[0].mxu0
    %v1376 = vadd.f32 0.0, %v1375
    %v1377 = vpop.f32.mrb[0].mxu0
    %1378 = vmatprep.mubr.bf16.mxu0 0
    %1379 = vmatmul.mubr.bf16.gmra.mrb[0].mxu0 %v647
    %v1380 = vpop.f32.mrb[0].mxu0
    %v1381 = vadd.f32 0.0, %v1380
    %v1382 = vpop.f32.mrb[0].mxu0
    %v1383 = vpop.f32.mrb[0].mxu0
    %v1384 = vadd.f32 0.0, %v1383
    %v1385 = vpop.f32.mrb[0].mxu0
    %1386 = vmatprep.mubr.bf16.mxu0 0
    %1387 = vmatmul.mubr.bf16.gmra.mrb[0].mxu0 %v650
    %v1388 = vpop.f32.mrb[0].mxu0
    %v1389 = vadd.f32 0.0, %v1388
    %v1390 = vpop.f32.mrb[0].mxu0
    %v1391 = vpop.f32.mrb[0].mxu0
    %v1392 = vadd.f32 0.0, %v1391
    %v1393 = vpop.f32.mrb[0].mxu0
    %1394 = vmatprep.mubr.bf16.mxu0 0
    %1395 = vmatmul.mubr.bf16.gmra.mrb[0].mxu0 %v653
    %v1396 = vpop.f32.mrb[0].mxu0
    %v1397 = vadd.f32 0.0, %v1396
    %v1398 = vpop.f32.mrb[0].mxu0
    %v1399 = vpop.f32.mrb[0].mxu0
    %v1400 = vadd.f32 0.0, %v1399
    %v1401 = vpop.f32.mrb[0].mxu0
    %1402 = vmatprep.mubr.bf16.mxu0 0
    %1403 = vmatmul.mubr.bf16.gmra.mrb[0].mxu0 %v656
    %v1404 = vpop.f32.mrb[0].mxu0
    %v1405 = vadd.f32 0.0, %v1404
    %v1406 = vpop.f32.mrb[0].mxu0
    %v1407 = vpop.f32.mrb[0].mxu0
    %v1408 = vadd.f32 0.0, %v1407
    %v1409 = vpop.f32.mrb[0].mxu0
    %1410 = vmatprep.mubr.bf16.mxu0 0
    %1411 = vmatmul.mubr.bf16.gmra.mrb[0].mxu0 %v659
    %v1412 = vpop.f32.mrb[0].mxu0
    %v1413 = vadd.f32 0.0, %v1412
    %v1414 = vpop.f32.mrb[0].mxu0
    %v1415 = vpop.f32.mrb[0].mxu0
    %v1416 = vadd.f32 0.0, %v1415
    %v1417 = vpop.f32.mrb[0].mxu0
    %1418 = vmatprep.mubr.bf16.mxu0 0
    %1419 = vmatmul.mubr.bf16.gmra.mrb[0].mxu0 %v662
    %v1420 = vpop.f32.mrb[0].mxu0
    %v1421 = vadd.f32 0.0, %v1420
    %v1422 = vpop.f32.mrb[0].mxu0
    %v1423 = vpop.f32.mrb[0].mxu0
    %v1424 = vadd.f32 0.0, %v1423
    %v1425 = vpop.f32.mrb[0].mxu0
    %1426 = vmatprep.mubr.bf16.mxu0 0
    %1427 = vmatmul.mubr.bf16.gmra.mrb[0].mxu0 %v665
    %v1428 = vpop.f32.mrb[0].mxu0
    %v1429 = vadd.f32 0.0, %v1428
    %v1430 = vpop.f32.mrb[0].mxu0
    %v1431 = vpop.f32.mrb[0].mxu0
    %v1432 = vadd.f32 0.0, %v1431
    %v1433 = vpop.f32.mrb[0].mxu0
    %1434 = vmatprep.mubr.bf16.mxu0 0
    %1435 = vmatmul.mubr.bf16.gmra.mrb[0].mxu0 %v668
    %v1436 = vpop.f32.mrb[0].mxu0
    %v1437 = vadd.f32 0.0, %v1436
    %v1438 = vpop.f32.mrb[0].mxu0
    %v1439 = vpop.f32.mrb[0].mxu0
    %v1440 = vadd.f32 0.0, %v1439
    %v1441 = vpop.f32.mrb[0].mxu0
    %1442 = vmatprep.mubr.bf16.mxu0 0
    %1443 = vmatmul.mubr.bf16.gmra.mrb[0].mxu0 %v671
    %v1444 = vpop.f32.mrb[0].mxu0
    %v1445 = vadd.f32 0.0, %v1444
    %v1446 = vpop.f32.mrb[0].mxu0
    %v1447 = vpop.f32.mrb[0].mxu0
    %v1448 = vadd.f32 0.0, %v1447
    %v1449 = vpop.f32.mrb[0].mxu0
    %1450 = vmatprep.mubr.bf16.mxu0 0
    %1451 = vmatmul.mubr.bf16.gmra.mrb[0].mxu0 %v674
    %v1452 = vpop.f32.mrb[0].mxu0
    %v1453 = vadd.f32 0.0, %v1452
    %v1454 = vpop.f32.mrb[0].mxu0
    %v1455 = vpop.f32.mrb[0].mxu0
    %v1456 = vadd.f32 0.0, %v1455
    %v1457 = vpop.f32.mrb[0].mxu0
    %1458 = vmatprep.mubr.bf16.mxu0 0
    %1459 = vmatmul.mubr.bf16.gmra.mrb[0].mxu0 %v677
    %v1460 = vpop.f32.mrb[0].mxu0
    %v1461 = vadd.f32 0.0, %v1460
    %v1462 = vpop.f32.mrb[0].mxu0
    %v1463 = vpop.f32.mrb[0].mxu0
    %v1464 = vadd.f32 0.0, %v1463
    %v1465 = vpop.f32.mrb[0].mxu0
    %1466 = vmatprep.mubr.bf16.mxu0 0
    %1467 = vmatmul.mubr.bf16.gmra.mrb[0].mxu0 %v680
    %v1468 = vpop.f32.mrb[0].mxu0
    %v1469 = vadd.f32 0.0, %v1468
    %v1470 = vpop.f32.mrb[0].mxu0
    %v1471 = vpop.f32.mrb[0].mxu0
    %v1472 = vadd.f32 0.0, %v1471
    %v1473 = vpop.f32.mrb[0].mxu0
    %1474 = vmatprep.mubr.bf16.mxu0 0
    %1475 = vmatmul.mubr.bf16.gmra.mrb[0].mxu0 %v683
    %v1476 = vpop.f32.mrb[0].mxu0
    %v1477 = vadd.f32 0.0, %v1476
    %v1478 = vpop.f32.mrb[0].mxu0
    %v1479 = vpop.f32.mrb[0].mxu0
    %v1480 = vadd.f32 0.0, %v1479
    %v1481 = vpop.f32.mrb[0].mxu0
    %1482 = vmatprep.mubr.bf16.mxu0 0
    %1483 = vmatmul.mubr.bf16.gmra.mrb[0].mxu0 %v686
    %v1484 = vpop.f32.mrb[0].mxu0
    %v1485 = vadd.f32 0.0, %v1484
    %v1486 = vpop.f32.mrb[0].mxu0
    %v1487 = vpop.f32.mrb[0].mxu0
    %v1488 = vadd.f32 0.0, %v1487
    %v1489 = vpop.f32.mrb[0].mxu0
    %1490 = vmatprep.mubr.bf16.mxu0 0
    %1491 = vmatmul.mubr.bf16.gmra.mrb[0].mxu0 %v689
    %v1492 = vpop.f32.mrb[0].mxu0
    %v1493 = vadd.f32 0.0, %v1492
    %v1494 = vpop.f32.mrb[0].mxu0
    %v1495 = vpop.f32.mrb[0].mxu0
    %v1496 = vadd.f32 0.0, %v1495
    %v1497 = vpop.f32.mrb[0].mxu0
    %1498 = vmatprep.mubr.bf16.mxu0 0
    %1499 = vmatmul.mubr.bf16.gmra.mrb[0].mxu0 %v692
    %v1500 = vpop.f32.mrb[0].mxu0
    %v1501 = vadd.f32 0.0, %v1500
    %v1502 = vpop.f32.mrb[0].mxu0
    %v1503 = vpop.f32.mrb[0].mxu0
    %v1504 = vadd.f32 0.0, %v1503
    %v1505 = vpop.f32.mrb[0].mxu0
    %1506 = vmatprep.mubr.bf16.mxu0 0
    %1507 = vmatmul.mubr.bf16.gmra.mrb[0].mxu0 %v695
    %v1508 = vpop.f32.mrb[0].mxu0
    %v1509 = vadd.f32 0.0, %v1508
    %v1510 = vpop.f32.mrb[0].mxu0
    %v1511 = vpop.f32.mrb[0].mxu0
    %v1512 = vadd.f32 0.0, %v1511
    %v1513 = vpop.f32.mrb[0].mxu0
    %1514 = vmatprep.mubr.bf16.mxu0 0
    %1515 = vmatmul.mubr.bf16.gmra.mrb[0].mxu0 %v698
    %v1516 = vpop.f32.mrb[0].mxu0
    %v1517 = vadd.f32 0.0, %v1516
    %v1518 = vpop.f32.mrb[0].mxu0
    %v1519 = vpop.f32.mrb[0].mxu0
    %v1520 = vadd.f32 0.0, %v1519
    %v1521 = vpop.f32.mrb[0].mxu0
    %1522 = vmatprep.mubr.bf16.mxu0 0
    %1523 = vmatmul.mubr.bf16.gmra.mrb[0].mxu0 %v701
    %v1524 = vpop.f32.mrb[0].mxu0
    %v1525 = vadd.f32 0.0, %v1524
    %v1526 = vpop.f32.mrb[0].mxu0
    %v1527 = vpop.f32.mrb[0].mxu0
    %v1528 = vadd.f32 0.0, %v1527
    %v1529 = vpop.f32.mrb[0].mxu0
    %1530 = vmatprep.mubr.bf16.mxu0 0
    %1531 = vmatmul.mubr.bf16.gmra.mrb[0].mxu0 %v704
    %v1532 = vpop.f32.mrb[0].mxu0
    %v1533 = vadd.f32 0.0, %v1532
    %v1534 = vpop.f32.mrb[0].mxu0
    %v1535 = vpop.f32.mrb[0].mxu0
    %v1536 = vadd.f32 0.0, %v1535
    %v1537 = vpop.f32.mrb[0].mxu0
    %1538 = vmatprep.mubr.bf16.mxu0 0
    %1539 = vmatmul.mubr.bf16.gmra.mrb[0].mxu0 %v707
    %v1540 = vpop.f32.mrb[0].mxu0
    %v1541 = vadd.f32 0.0, %v1540
    %v1542 = vpop.f32.mrb[0].mxu0
    %v1543 = vpop.f32.mrb[0].mxu0
    %v1544 = vadd.f32 0.0, %v1543
    %v1545 = vpop.f32.mrb[0].mxu0
    %1546 = vmatprep.mubr.bf16.mxu0 0
    %1547 = vmatmul.mubr.bf16.gmra.mrb[0].mxu0 %v710
    %v1548 = vpop.f32.mrb[0].mxu0
    %v1549 = vadd.f32 0.0, %v1548
    %v1550 = vpop.f32.mrb[0].mxu0
    %v1551 = vpop.f32.mrb[0].mxu0
    %v1552 = vadd.f32 0.0, %v1551
    %v1553 = vpop.f32.mrb[0].mxu0
    %1554 = vmatprep.mubr.bf16.mxu0 0
    %1555 = vmatmul.mubr.bf16.gmra.mrb[0].mxu0 %v713
    %v1556 = vpop.f32.mrb[0].mxu0
    %v1557 = vadd.f32 0.0, %v1556
    %v1558 = vpop.f32.mrb[0].mxu0
    %v1559 = vpop.f32.mrb[0].mxu0
    %v1560 = vadd.f32 0.0, %v1559
    %v1561 = vpop.f32.mrb[0].mxu0
    %1562 = vmatprep.mubr.bf16.mxu0 0
    %1563 = vmatmul.mubr.bf16.gmra.mrb[0].mxu0 %v716
    %v1564 = vpop.f32.mrb[0].mxu0
    %v1565 = vadd.f32 0.0, %v1564
    %v1566 = vpop.f32.mrb[0].mxu0
    %v1567 = vpop.f32.mrb[0].mxu0
    %v1568 = vadd.f32 0.0, %v1567
    %v1569 = vpop.f32.mrb[0].mxu0
    %1570 = vmatprep.mubr.bf16.mxu0 0
    %1571 = vmatmul.mubr.bf16.gmra.mrb[0].mxu0 %v719
    %v1572 = vpop.f32.mrb[0].mxu0
    %v1573 = vadd.f32 0.0, %v1572
    %v1574 = vpop.f32.mrb[0].mxu0
    %v1575 = vpop.f32.mrb[0].mxu0
    %v1576 = vadd.f32 0.0, %v1575
    %v1577 = vpop.f32.mrb[0].mxu0
    %1578 = vmatprep.mubr.bf16.mxu0 0
    %1579 = vmatmul.mubr.bf16.gmra.mrb[0].mxu0 %v722
    %v1580 = vpop.f32.mrb[0].mxu0
    %v1581 = vadd.f32 0.0, %v1580
    %v1582 = vpop.f32.mrb[0].mxu0
    %v1583 = vpop.f32.mrb[0].mxu0
    %v1584 = vadd.f32 0.0, %v1583
    %v1585 = vpop.f32.mrb[0].mxu0
    %1586 = vmatprep.mubr.bf16.mxu0 0
    %1587 = vmatmul.mubr.bf16.gmra.mrb[0].mxu0 %v725
    %v1588 = vpop.f32.mrb[0].mxu0
    %v1589 = vadd.f32 0.0, %v1588
    %v1590 = vpop.f32.mrb[0].mxu0
    %v1591 = vpop.f32.mrb[0].mxu0
    %v1592 = vadd.f32 0.0, %v1591
    %v1593 = vpop.f32.mrb[0].mxu0
    %1594 = vmatprep.mubr.bf16.mxu0 0
    %1595 = vmatmul.mubr.bf16.gmra.mrb[0].mxu0 %v728
    %v1596 = vpop.f32.mrb[0].mxu0
    %v1597 = vadd.f32 0.0, %v1596
    %v1598 = vpop.f32.mrb[0].mxu0
    %v1599 = vpop.f32.mrb[0].mxu0
    %v1600 = vadd.f32 0.0, %v1599
    %v1601 = vpop.f32.mrb[0].mxu0
    %1602 = vmatprep.mubr.bf16.mxu0 0
    %1603 = vmatmul.mubr.bf16.gmra.mrb[0].mxu0 %v731
    %v1604 = vpop.f32.mrb[0].mxu0
    %v1605 = vadd.f32 0.0, %v1604
    %v1606 = vpop.f32.mrb[0].mxu0
    %v1607 = vpop.f32.mrb[0].mxu0
    %v1608 = vadd.f32 0.0, %v1607
    %v1609 = vpop.f32.mrb[0].mxu0
    %1610 = vmatprep.mubr.bf16.mxu0 0
    %1611 = vmatmul.mubr.bf16.gmra.mrb[0].mxu0 %v734
    %v1612 = vpop.f32.mrb[0].mxu0
    %v1613 = vadd.f32 0.0, %v1612
    %v1614 = vpop.f32.mrb[0].mxu0
    %v1615 = vpop.f32.mrb[0].mxu0
    %v1616 = vadd.f32 0.0, %v1615
    %v1617 = vpop.f32.mrb[0].mxu0
    %1618 = vmatprep.mubr.bf16.mxu0 0
    %1619 = vmatmul.mubr.bf16.gmra.mrb[0].mxu0 %v737
    %v1620 = vpop.f32.mrb[0].mxu0
    %v1621 = vadd.f32 0.0, %v1620
    %v1622 = vpop.f32.mrb[0].mxu0
    %v1623 = vpop.f32.mrb[0].mxu0
    %v1624 = vadd.f32 0.0, %v1623
    %v1625 = vpop.f32.mrb[0].mxu0
    %1626 = vmatprep.mubr.bf16.mxu0 0
    %1627 = vmatmul.mubr.bf16.gmra.mrb[0].mxu0 %v740
    %v1628 = vpop.f32.mrb[0].mxu0
    %v1629 = vadd.f32 0.0, %v1628
    %v1630 = vpop.f32.mrb[0].mxu0
    %v1631 = vpop.f32.mrb[0].mxu0
    %v1632 = vadd.f32 0.0, %v1631
    %v1633 = vpop.f32.mrb[0].mxu0
    %1634 = vmatprep.mubr.bf16.mxu0 0
    %1635 = vmatmul.mubr.bf16.gmra.mrb[0].mxu0 %v743
    %v1636 = vpop.f32.mrb[0].mxu0
    %v1637 = vadd.f32 0.0, %v1636
    %v1638 = vpop.f32.mrb[0].mxu0
    %v1639 = vpop.f32.mrb[0].mxu0
    %v1640 = vadd.f32 0.0, %v1639
    %v1641 = vpop.f32.mrb[0].mxu0
    %1642 = vmatprep.mubr.bf16.mxu0 0
    %1643 = vmatmul.mubr.bf16.gmra.mrb[0].mxu0 %v746
    %v1644 = vpop.f32.mrb[0].mxu0
    %v1645 = vadd.f32 0.0, %v1644
    %v1646 = vpop.f32.mrb[0].mxu0
    %v1647 = vpop.f32.mrb[0].mxu0
    %v1648 = vadd.f32 0.0, %v1647
    %v1649 = vpop.f32.mrb[0].mxu0
    %1650 = vmatprep.mubr.bf16.mxu0 0
    %1651 = vmatmul.mubr.bf16.gmra.mrb[0].mxu0 %v749
    %v1652 = vpop.f32.mrb[0].mxu0
    %v1653 = vadd.f32 0.0, %v1652
    %v1654 = vpop.f32.mrb[0].mxu0
    %v1655 = vpop.f32.mrb[0].mxu0
    %v1656 = vadd.f32 0.0, %v1655
    %v1657 = vpop.f32.mrb[0].mxu0
    %1658 = vmatprep.mubr.bf16.mxu0 0
    %1659 = vmatmul.mubr.bf16.gmra.mrb[0].mxu0 %v752
    %v1660 = vpop.f32.mrb[0].mxu0
    %v1661 = vadd.f32 0.0, %v1660
    %v1662 = vpop.f32.mrb[0].mxu0
    %v1663 = vpop.f32.mrb[0].mxu0
    %v1664 = vadd.f32 0.0, %v1663
    %v1665 = vpop.f32.mrb[0].mxu0
    %1666 = vmatprep.mubr.bf16.mxu0 0
    %1667 = vmatmul.mubr.bf16.gmra.mrb[0].mxu0 %v755
    %v1668 = vpop.f32.mrb[0].mxu0
    %v1669 = vadd.f32 0.0, %v1668
    %v1670 = vpop.f32.mrb[0].mxu0
    %v1671 = vpop.f32.mrb[0].mxu0
    %v1672 = vadd.f32 0.0, %v1671
    %v1673 = vpop.f32.mrb[0].mxu0
    %1674 = vmatprep.mubr.bf16.mxu0 0
    %1675 = vmatmul.mubr.bf16.gmra.mrb[0].mxu0 %v758
    %v1676 = vpop.f32.mrb[0].mxu0
    %v1677 = vadd.f32 0.0, %v1676
    %v1678 = vpop.f32.mrb[0].mxu0
    %v1679 = vpop.f32.mrb[0].mxu0
    %v1680 = vadd.f32 0.0, %v1679
    %v1681 = vpop.f32.mrb[0].mxu0
    %1682 = vmatprep.mubr.bf16.mxu0 0
    %1683 = vmatmul.mubr.bf16.gmra.mrb[0].mxu0 %v761
    %v1684 = vpop.f32.mrb[0].mxu0
    %v1685 = vadd.f32 0.0, %v1684
    %v1686 = vpop.f32.mrb[0].mxu0
    %v1687 = vpop.f32.mrb[0].mxu0
    %v1688 = vadd.f32 0.0, %v1687
    %v1689 = vpop.f32.mrb[0].mxu0
    %1690 = vmatprep.mubr.bf16.mxu0 0
    %1691 = vmatmul.mubr.bf16.gmra.mrb[0].mxu0 %v764
    %v1692 = vpop.f32.mrb[0].mxu0
    %v1693 = vadd.f32 0.0, %v1692
    %v1694 = vpop.f32.mrb[0].mxu0
    %v1695 = vpop.f32.mrb[0].mxu0
    %v1696 = vadd.f32 0.0, %v1695
    %v1697 = vpop.f32.mrb[0].mxu0
    %1698 = vmatprep.mubr.bf16.mxu0 0
    %1699 = vmatmul.mubr.bf16.gmra.mrb[0].mxu0 %v767
    %v1700 = vpop.f32.mrb[0].mxu0
    %v1701 = vadd.f32 0.0, %v1700
    %v1702 = vpop.f32.mrb[0].mxu0
    %v1703 = vpop.f32.mrb[0].mxu0
    %v1704 = vadd.f32 0.0, %v1703
    %v1705 = vpop.f32.mrb[0].mxu0
    %1706 = vmatprep.mubr.bf16.mxu0 0
    %1707 = vmatmul.mubr.bf16.gmra.mrb[0].mxu0 %v770
    %v1708 = vpop.f32.mrb[0].mxu0
    %v1709 = vadd.f32 0.0, %v1708
    %v1710 = vpop.f32.mrb[0].mxu0
    %v1711 = vpop.f32.mrb[0].mxu0
    %v1712 = vadd.f32 0.0, %v1711
    %v1713 = vpop.f32.mrb[0].mxu0
    %1714 = vmatprep.mubr.bf16.mxu0 0
    %1715 = vmatmul.mubr.bf16.gmra.mrb[0].mxu0 %v773
    %v1716 = vpop.f32.mrb[0].mxu0
    %v1717 = vadd.f32 0.0, %v1716
    %v1718 = vpop.f32.mrb[0].mxu0
    %v1719 = vpop.f32.mrb[0].mxu0
    %v1720 = vadd.f32 0.0, %v1719
    %v1721 = vpop.f32.mrb[0].mxu0
    %1722 = vmatprep.mubr.bf16.mxu0 0
    %1723 = vmatmul.mubr.bf16.gmra.mrb[0].mxu0 %v776
    %v1724 = vpop.f32.mrb[0].mxu0
    %v1725 = vadd.f32 0.0, %v1724
    %v1726 = vpop.f32.mrb[0].mxu0
    %v1727 = vpop.f32.mrb[0].mxu0
    %v1728 = vadd.f32 0.0, %v1727
    %v1729 = vpop.f32.mrb[0].mxu0
    %1730 = vmatprep.mubr.bf16.mxu0 0
    %1731 = vmatmul.mubr.bf16.gmra.mrb[0].mxu0 %v779
    %v1732 = vpop.f32.mrb[0].mxu0
    %v1733 = vadd.f32 0.0, %v1732
    %v1734 = vpop.f32.mrb[0].mxu0
    %v1735 = vpop.f32.mrb[0].mxu0
    %v1736 = vadd.f32 0.0, %v1735
    %v1737 = vpop.f32.mrb[0].mxu0
    %1738 = vmatprep.mubr.bf16.mxu0 0
    %1739 = vmatmul.mubr.bf16.gmra.mrb[0].mxu0 %v782
    %v1740 = vpop.f32.mrb[0].mxu0
    %v1741 = vadd.f32 0.0, %v1740
    %v1742 = vpop.f32.mrb[0].mxu0
    %v1743 = vpop.f32.mrb[0].mxu0
    %v1744 = vadd.f32 0.0, %v1743
    %v1745 = vpop.f32.mrb[0].mxu0
    %1746 = vmatprep.mubr.bf16.mxu0 0
    %1747 = vmatmul.mubr.bf16.gmra.mrb[0].mxu0 %v785
    %v1748 = vpop.f32.mrb[0].mxu0
    %v1749 = vadd.f32 0.0, %v1748
    %v1750 = vpop.f32.mrb[0].mxu0
    %v1751 = vpop.f32.mrb[0].mxu0
    %v1752 = vadd.f32 0.0, %v1751
    %v1753 = vpop.f32.mrb[0].mxu0
    %1754 = vmatprep.mubr.bf16.mxu0 0
    %1755 = vmatmul.mubr.bf16.gmra.mrb[0].mxu0 %v788
    %v1756 = vpop.f32.mrb[0].mxu0
    %v1757 = vadd.f32 0.0, %v1756
    %v1758 = vpop.f32.mrb[0].mxu0
    %v1759 = vpop.f32.mrb[0].mxu0
    %v1760 = vadd.f32 0.0, %v1759
    %v1761 = vpop.f32.mrb[0].mxu0
    %1762 = vmatprep.mubr.bf16.mxu0 0
    %1763 = vmatmul.mubr.bf16.gmra.mrb[0].mxu0 %v791
    %v1764 = vpop.f32.mrb[0].mxu0
    %v1765 = vadd.f32 0.0, %v1764
    %v1766 = vpop.f32.mrb[0].mxu0
    %v1767 = vpop.f32.mrb[0].mxu0
    %v1768 = vadd.f32 0.0, %v1767
    %v1769 = vpop.f32.mrb[0].mxu0
    %1770 = vmatprep.mubr.bf16.mxu0 0
    %1771 = vmatmul.mubr.bf16.gmra.mrb[0].mxu0 %v794
    %v1772 = vpop.f32.mrb[0].mxu0
    %v1773 = vadd.f32 0.0, %v1772
    %v1774 = vpop.f32.mrb[0].mxu0
    %v1775 = vpop.f32.mrb[0].mxu0
    %v1776 = vadd.f32 0.0, %v1775
    %v1777 = vpop.f32.mrb[0].mxu0
    %1778 = vmatprep.mubr.bf16.mxu0 0
    %1779 = vmatmul.mubr.bf16.gmra.mrb[0].mxu0 %v797
    %v1780 = vpop.f32.mrb[0].mxu0
    %v1781 = vadd.f32 0.0, %v1780
    %v1782 = vpop.f32.mrb[0].mxu0
    %v1783 = vpop.f32.mrb[0].mxu0
    %v1784 = vadd.f32 0.0, %v1783
    %v1785 = vpop.f32.mrb[0].mxu0
    %1786 = vmatprep.mubr.bf16.mxu0 0
    %1787 = vmatmul.mubr.bf16.gmra.mrb[0].mxu0 %v800
    %v1788 = vpop.f32.mrb[0].mxu0
    %v1789 = vadd.f32 0.0, %v1788
    %v1790 = vpop.f32.mrb[0].mxu0
    %v1791 = vpop.f32.mrb[0].mxu0
    %v1792 = vadd.f32 0.0, %v1791
    %v1793 = vpop.f32.mrb[0].mxu0
    %1794 = vmatprep.mubr.bf16.mxu0 0
    %1795 = vmatmul.mubr.bf16.gmra.mrb[0].mxu0 %v803
    %v1796 = vpop.f32.mrb[0].mxu0
    %v1797 = vadd.f32 0.0, %v1796
    %v1798 = vpop.f32.mrb[0].mxu0
    %v1799 = vpop.f32.mrb[0].mxu0
    %v1800 = vadd.f32 0.0, %v1799
    %v1801 = vpop.f32.mrb[0].mxu0
    %1802 = vmatprep.mubr.bf16.mxu0 0
    %1803 = vmatmul.mubr.bf16.gmra.mrb[0].mxu0 %v806
    %v1804 = vpop.f32.mrb[0].mxu0
    %v1805 = vadd.f32 0.0, %v1804
    %v1806 = vpop.f32.mrb[0].mxu0
    %v1807 = vpop.f32.mrb[0].mxu0
    %v1808 = vadd.f32 0.0, %v1807
    %v1809 = vpop.f32.mrb[0].mxu0
    %1810 = vmatprep.mubr.bf16.mxu0 0
    %1811 = vmatmul.mubr.bf16.gmra.mrb[0].mxu0 %v809
    %v1812 = vpop.f32.mrb[0].mxu0
    %v1813 = vadd.f32 0.0, %v1812
    %v1814 = vpop.f32.mrb[0].mxu0
    %v1815 = vpop.f32.mrb[0].mxu0
    %v1816 = vadd.f32 0.0, %v1815
    %v1817 = vpop.f32.mrb[0].mxu0
    %1818 = vmatprep.mubr.bf16.mxu0 0
    %1819 = vmatmul.mubr.bf16.gmra.mrb[0].mxu0 %v812
    %v1820 = vpop.f32.mrb[0].mxu0
    %v1821 = vadd.f32 0.0, %v1820
    %v1822 = vpop.f32.mrb[0].mxu0
    %v1823 = vpop.f32.mrb[0].mxu0
    %v1824 = vadd.f32 0.0, %v1823
    %v1825 = vpop.f32.mrb[0].mxu0
    %1826 = vmatprep.mubr.bf16.mxu0 0
    %1827 = vmatmul.mubr.bf16.gmra.mrb[0].mxu0 %v815
    %v1828 = vpop.f32.mrb[0].mxu0
    %v1829 = vadd.f32 0.0, %v1828
    %v1830 = vpop.f32.mrb[0].mxu0
    %v1831 = vpop.f32.mrb[0].mxu0
    %v1832 = vadd.f32 0.0, %v1831
    %v1833 = vpop.f32.mrb[0].mxu0
    %1834 = vmatprep.mubr.bf16.mxu0 0
    %1835 = vmatmul.mubr.bf16.gmra.mrb[0].mxu0 %v818
    %v1836 = vpop.f32.mrb[0].mxu0
    %v1837 = vadd.f32 0.0, %v1836
    %v1838 = vpop.f32.mrb[0].mxu0
    %v1839 = vpop.f32.mrb[0].mxu0
    %v1840 = vadd.f32 0.0, %v1839
    %v1841 = vpop.f32.mrb[0].mxu0
    %1842 = vmatprep.mubr.bf16.mxu0 0
    %1843 = vmatmul.mubr.bf16.gmra.mrb[0].mxu0 %v821
    %v1844 = vpop.f32.mrb[0].mxu0
    %v1845 = vadd.f32 0.0, %v1844
    %v1846 = vpop.f32.mrb[0].mxu0
    %v1847 = vpop.f32.mrb[0].mxu0
    %v1848 = vadd.f32 0.0, %v1847
    %v1849 = vpop.f32.mrb[0].mxu0
    %1850 = vmatprep.mubr.bf16.mxu0 0
    %1851 = vmatmul.mubr.bf16.gmra.mrb[0].mxu0 %v824
    %v1852 = vpop.f32.mrb[0].mxu0
    %v1853 = vadd.f32 0.0, %v1852
    %v1854 = vpop.f32.mrb[0].mxu0
    %v1855 = vpop.f32.mrb[0].mxu0
    %v1856 = vadd.f32 0.0, %v1855
    %v1857 = vpop.f32.mrb[0].mxu0
    %1858 = vmatprep.mubr.bf16.mxu0 0
    %1859 = vmatmul.mubr.bf16.gmra.mrb[0].mxu0 %v827
    %v1860 = vpop.f32.mrb[0].mxu0
    %v1861 = vadd.f32 0.0, %v1860
    %v1862 = vpop.f32.mrb[0].mxu0
    %v1863 = vpop.f32.mrb[0].mxu0
    %v1864 = vadd.f32 0.0, %v1863
    %v1865 = vpop.f32.mrb[0].mxu0
    %1866 = vmatprep.mubr.bf16.mxu0 0
    %1867 = vmatmul.mubr.bf16.gmra.mrb[0].mxu0 %v830
    %v1868 = vpop.f32.mrb[0].mxu0
    %v1869 = vadd.f32 0.0, %v1868
    %v1870 = vpop.f32.mrb[0].mxu0
    %v1871 = vpop.f32.mrb[0].mxu0
    %v1872 = vadd.f32 0.0, %v1871
    %v1873 = vpop.f32.mrb[0].mxu0
    %1874 = vmatprep.mubr.bf16.mxu0 0
    %1875 = vmatmul.mubr.bf16.gmra.mrb[0].mxu0 %v833
    %v1876 = vpop.f32.mrb[0].mxu0
    %v1877 = vadd.f32 0.0, %v1876
    %v1878 = vpop.f32.mrb[0].mxu0
    %v1879 = vpop.f32.mrb[0].mxu0
    %v1880 = vadd.f32 0.0, %v1879
    %v1881 = vpop.f32.mrb[0].mxu0
    %1882 = vmatprep.mubr.bf16.mxu0 0
    %1883 = vmatmul.mubr.bf16.gmra.mrb[0].mxu0 %v836
    %v1884 = vpop.f32.mrb[0].mxu0
    %v1885 = vadd.f32 0.0, %v1884
    %v1886 = vpop.f32.mrb[0].mxu0
    %v1887 = vpop.f32.mrb[0].mxu0
    %v1888 = vadd.f32 0.0, %v1887
    %v1889 = vpop.f32.mrb[0].mxu0
    %1890 = vmatprep.mubr.bf16.mxu0 0
    %1891 = vmatmul.mubr.bf16.gmra.mrb[0].mxu0 %v839
    %v1892 = vpop.f32.mrb[0].mxu0
    %v1893 = vadd.f32 0.0, %v1892
    %v1894 = vpop.f32.mrb[0].mxu0
    %v1895 = vpop.f32.mrb[0].mxu0
    %v1896 = vadd.f32 0.0, %v1895
    %v1897 = vpop.f32.mrb[0].mxu0
    %1898 = vmatprep.mubr.bf16.mxu0 0
    %1899 = vmatmul.mubr.bf16.gmra.mrb[0].mxu0 %v842
    %v1900 = vpop.f32.mrb[0].mxu0
    %v1901 = vadd.f32 0.0, %v1900
    %v1902 = vpop.f32.mrb[0].mxu0
    %v1903 = vpop.f32.mrb[0].mxu0
    %v1904 = vadd.f32 0.0, %v1903
    %v1905 = vpop.f32.mrb[0].mxu0
    %1906 = vdwg.mxu0
    %v1907 = vld [vmem:[%s2] sm:$0x1]
    %v1909 = vlaneseq
    %v1910 = vshrl.u32 %v1909, 7
    %v1911 = vsub.s32 0, %v1910
    %v1912 = vrot.slane %v1907, %v1911
    %v1914 = vmul.f32 %v885, %v1912
    %v1915 = vmul.f32 %v888, %v1912
    %v1916 = vmul.f32 %v893, %v1912
    %v1917 = vmul.f32 %v896, %v1912
    %v1918 = vmul.f32 %v901, %v1912
    %v1919 = vmul.f32 %v904, %v1912
    %v1920 = vmul.f32 %v909, %v1912
    %v1921 = vmul.f32 %v912, %v1912
    %v1922 = vmul.f32 %v917, %v1912
    %v1923 = vmul.f32 %v920, %v1912
    %v1924 = vmul.f32 %v925, %v1912
    %v1925 = vmul.f32 %v928, %v1912
    %v1926 = vmul.f32 %v933, %v1912
    %v1927 = vmul.f32 %v936, %v1912
    %v1928 = vmul.f32 %v941, %v1912
    %v1929 = vmul.f32 %v944, %v1912
    %v1930 = vmul.f32 %v949, %v1912
    %v1931 = vmul.f32 %v952, %v1912
    %v1932 = vmul.f32 %v957, %v1912
    %v1933 = vmul.f32 %v960, %v1912
    %v1934 = vmul.f32 %v965, %v1912
    %v1935 = vmul.f32 %v968, %v1912
    %v1936 = vmul.f32 %v973, %v1912
    %v1937 = vmul.f32 %v976, %v1912
    %v1938 = vmul.f32 %v981, %v1912
    %v1939 = vmul.f32 %v984, %v1912
    %v1940 = vmul.f32 %v989, %v1912
    %v1941 = vmul.f32 %v992, %v1912
    %v1942 = vmul.f32 %v997, %v1912
    %v1943 = vmul.f32 %v1000, %v1912
    %v1944 = vmul.f32 %v1005, %v1912
    %v1945 = vmul.f32 %v1008, %v1912
    %v1946 = vmul.f32 %v1013, %v1912
    %v1947 = vmul.f32 %v1016, %v1912
    %v1948 = vmul.f32 %v1021, %v1912
    %v1949 = vmul.f32 %v1024, %v1912
    %v1950 = vmul.f32 %v1029, %v1912
    %v1951 = vmul.f32 %v1032, %v1912
    %v1952 = vmul.f32 %v1037, %v1912
    %v1953 = vmul.f32 %v1040, %v1912
    %v1954 = vmul.f32 %v1045, %v1912
    %v1955 = vmul.f32 %v1048, %v1912
    %v1956 = vmul.f32 %v1053, %v1912
    %v1957 = vmul.f32 %v1056, %v1912
    %v1958 = vmul.f32 %v1061, %v1912
    %v1959 = vmul.f32 %v1064, %v1912
    %v1960 = vmul.f32 %v1069, %v1912
    %v1961 = vmul.f32 %v1072, %v1912
    %v1962 = vmul.f32 %v1077, %v1912
    %v1963 = vmul.f32 %v1080, %v1912
    %v1964 = vmul.f32 %v1085, %v1912
    %v1965 = vmul.f32 %v1088, %v1912
    %v1966 = vmul.f32 %v1093, %v1912
    %v1967 = vmul.f32 %v1096, %v1912
    %v1968 = vmul.f32 %v1101, %v1912
    %v1969 = vmul.f32 %v1104, %v1912
    %v1970 = vmul.f32 %v1109, %v1912
    %v1971 = vmul.f32 %v1112, %v1912
    %v1972 = vmul.f32 %v1117, %v1912
    %v1973 = vmul.f32 %v1120, %v1912
    %v1974 = vmul.f32 %v1125, %v1912
    %v1975 = vmul.f32 %v1128, %v1912
    %v1976 = vmul.f32 %v1133, %v1912
    %v1977 = vmul.f32 %v1136, %v1912
    %v1978 = vmul.f32 %v1141, %v1912
    %v1979 = vmul.f32 %v1144, %v1912
    %v1980 = vmul.f32 %v1149, %v1912
    %v1981 = vmul.f32 %v1152, %v1912
    %v1982 = vmul.f32 %v1157, %v1912
    %v1983 = vmul.f32 %v1160, %v1912
    %v1984 = vmul.f32 %v1165, %v1912
    %v1985 = vmul.f32 %v1168, %v1912
    %v1986 = vmul.f32 %v1173, %v1912
    %v1987 = vmul.f32 %v1176, %v1912
    %v1988 = vmul.f32 %v1181, %v1912
    %v1989 = vmul.f32 %v1184, %v1912
    %v1990 = vmul.f32 %v1189, %v1912
    %v1991 = vmul.f32 %v1192, %v1912
    %v1992 = vmul.f32 %v1197, %v1912
    %v1993 = vmul.f32 %v1200, %v1912
    %v1994 = vmul.f32 %v1205, %v1912
    %v1995 = vmul.f32 %v1208, %v1912
    %v1996 = vmul.f32 %v1213, %v1912
    %v1997 = vmul.f32 %v1216, %v1912
    %v1998 = vmul.f32 %v1221, %v1912
    %v1999 = vmul.f32 %v1224, %v1912
    %v2000 = vmul.f32 %v1229, %v1912
    %v2001 = vmul.f32 %v1232, %v1912
    %v2002 = vmul.f32 %v1237, %v1912
    %v2003 = vmul.f32 %v1240, %v1912
    %v2004 = vmul.f32 %v1245, %v1912
    %v2005 = vmul.f32 %v1248, %v1912
    %v2006 = vmul.f32 %v1253, %v1912
    %v2007 = vmul.f32 %v1256, %v1912
    %v2008 = vmul.f32 %v1261, %v1912
    %v2009 = vmul.f32 %v1264, %v1912
    %v2010 = vmul.f32 %v1269, %v1912
    %v2011 = vmul.f32 %v1272, %v1912
    %v2012 = vmul.f32 %v1277, %v1912
    %v2013 = vmul.f32 %v1280, %v1912
    %v2014 = vmul.f32 %v1285, %v1912
    %v2015 = vmul.f32 %v1288, %v1912
    %v2016 = vmul.f32 %v1293, %v1912
    %v2017 = vmul.f32 %v1296, %v1912
    %v2018 = vmul.f32 %v1301, %v1912
    %v2019 = vmul.f32 %v1304, %v1912
    %v2020 = vmul.f32 %v1309, %v1912
    %v2021 = vmul.f32 %v1312, %v1912
    %v2022 = vmul.f32 %v1317, %v1912
    %v2023 = vmul.f32 %v1320, %v1912
    %v2024 = vmul.f32 %v1325, %v1912
    %v2025 = vmul.f32 %v1328, %v1912
    %v2026 = vmul.f32 %v1333, %v1912
    %v2027 = vmul.f32 %v1336, %v1912
    %v2028 = vmul.f32 %v1341, %v1912
    %v2029 = vmul.f32 %v1344, %v1912
    %v2030 = vmul.f32 %v1349, %v1912
    %v2031 = vmul.f32 %v1352, %v1912
    %v2032 = vmul.f32 %v1357, %v1912
    %v2033 = vmul.f32 %v1360, %v1912
    %v2034 = vmul.f32 %v1365, %v1912
    %v2035 = vmul.f32 %v1368, %v1912
    %v2036 = vmul.f32 %v1373, %v1912
    %v2037 = vmul.f32 %v1376, %v1912
    %v2038 = vmul.f32 %v1381, %v1912
    %v2039 = vmul.f32 %v1384, %v1912
    %v2040 = vmul.f32 %v1389, %v1912
    %v2041 = vmul.f32 %v1392, %v1912
    %v2042 = vmul.f32 %v1397, %v1912
    %v2043 = vmul.f32 %v1400, %v1912
    %v2044 = vmul.f32 %v1405, %v1912
    %v2045 = vmul.f32 %v1408, %v1912
    %v2046 = vmul.f32 %v1413, %v1912
    %v2047 = vmul.f32 %v1416, %v1912
    %v2048 = vmul.f32 %v1421, %v1912
    %v2049 = vmul.f32 %v1424, %v1912
    %v2050 = vmul.f32 %v1429, %v1912
    %v2051 = vmul.f32 %v1432, %v1912
    %v2052 = vmul.f32 %v1437, %v1912
    %v2053 = vmul.f32 %v1440, %v1912
    %v2054 = vmul.f32 %v1445, %v1912
    %v2055 = vmul.f32 %v1448, %v1912
    %v2056 = vmul.f32 %v1453, %v1912
    %v2057 = vmul.f32 %v1456, %v1912
    %v2058 = vmul.f32 %v1461, %v1912
    %v2059 = vmul.f32 %v1464, %v1912
    %v2060 = vmul.f32 %v1469, %v1912
    %v2061 = vmul.f32 %v1472, %v1912
    %v2062 = vmul.f32 %v1477, %v1912
    %v2063 = vmul.f32 %v1480, %v1912
    %v2064 = vmul.f32 %v1485, %v1912
    %v2065 = vmul.f32 %v1488, %v1912
    %v2066 = vmul.f32 %v1493, %v1912
    %v2067 = vmul.f32 %v1496, %v1912
    %v2068 = vmul.f32 %v1501, %v1912
    %v2069 = vmul.f32 %v1504, %v1912
    %v2070 = vmul.f32 %v1509, %v1912
    %v2071 = vmul.f32 %v1512, %v1912
    %v2072 = vmul.f32 %v1517, %v1912
    %v2073 = vmul.f32 %v1520, %v1912
    %v2074 = vmul.f32 %v1525, %v1912
    %v2075 = vmul.f32 %v1528, %v1912
    %v2076 = vmul.f32 %v1533, %v1912
    %v2077 = vmul.f32 %v1536, %v1912
    %v2078 = vmul.f32 %v1541, %v1912
    %v2079 = vmul.f32 %v1544, %v1912
    %v2080 = vmul.f32 %v1549, %v1912
    %v2081 = vmul.f32 %v1552, %v1912
    %v2082 = vmul.f32 %v1557, %v1912
    %v2083 = vmul.f32 %v1560, %v1912
    %v2084 = vmul.f32 %v1565, %v1912
    %v2085 = vmul.f32 %v1568, %v1912
    %v2086 = vmul.f32 %v1573, %v1912
    %v2087 = vmul.f32 %v1576, %v1912
    %v2088 = vmul.f32 %v1581, %v1912
    %v2089 = vmul.f32 %v1584, %v1912
    %v2090 = vmul.f32 %v1589, %v1912
    %v2091 = vmul.f32 %v1592, %v1912
    %v2092 = vmul.f32 %v1597, %v1912
    %v2093 = vmul.f32 %v1600, %v1912
    %v2094 = vmul.f32 %v1605, %v1912
    %v2095 = vmul.f32 %v1608, %v1912
    %v2096 = vmul.f32 %v1613, %v1912
    %v2097 = vmul.f32 %v1616, %v1912
    %v2098 = vmul.f32 %v1621, %v1912
    %v2099 = vmul.f32 %v1624, %v1912
    %v2100 = vmul.f32 %v1629, %v1912
    %v2101 = vmul.f32 %v1632, %v1912
    %v2102 = vmul.f32 %v1637, %v1912
    %v2103 = vmul.f32 %v1640, %v1912
    %v2104 = vmul.f32 %v1645, %v1912
    %v2105 = vmul.f32 %v1648, %v1912
    %v2106 = vmul.f32 %v1653, %v1912
    %v2107 = vmul.f32 %v1656, %v1912
    %v2108 = vmul.f32 %v1661, %v1912
    %v2109 = vmul.f32 %v1664, %v1912
    %v2110 = vmul.f32 %v1669, %v1912
    %v2111 = vmul.f32 %v1672, %v1912
    %v2112 = vmul.f32 %v1677, %v1912
    %v2113 = vmul.f32 %v1680, %v1912
    %v2114 = vmul.f32 %v1685, %v1912
    %v2115 = vmul.f32 %v1688, %v1912
    %v2116 = vmul.f32 %v1693, %v1912
    %v2117 = vmul.f32 %v1696, %v1912
    %v2118 = vmul.f32 %v1701, %v1912
    %v2119 = vmul.f32 %v1704, %v1912
    %v2120 = vmul.f32 %v1709, %v1912
    %v2121 = vmul.f32 %v1712, %v1912
    %v2122 = vmul.f32 %v1717, %v1912
    %v2123 = vmul.f32 %v1720, %v1912
    %v2124 = vmul.f32 %v1725, %v1912
    %v2125 = vmul.f32 %v1728, %v1912
    %v2126 = vmul.f32 %v1733, %v1912
    %v2127 = vmul.f32 %v1736, %v1912
    %v2128 = vmul.f32 %v1741, %v1912
    %v2129 = vmul.f32 %v1744, %v1912
    %v2130 = vmul.f32 %v1749, %v1912
    %v2131 = vmul.f32 %v1752, %v1912
    %v2132 = vmul.f32 %v1757, %v1912
    %v2133 = vmul.f32 %v1760, %v1912
    %v2134 = vmul.f32 %v1765, %v1912
    %v2135 = vmul.f32 %v1768, %v1912
    %v2136 = vmul.f32 %v1773, %v1912
    %v2137 = vmul.f32 %v1776, %v1912
    %v2138 = vmul.f32 %v1781, %v1912
    %v2139 = vmul.f32 %v1784, %v1912
    %v2140 = vmul.f32 %v1789, %v1912
    %v2141 = vmul.f32 %v1792, %v1912
    %v2142 = vmul.f32 %v1797, %v1912
    %v2143 = vmul.f32 %v1800, %v1912
    %v2144 = vmul.f32 %v1805, %v1912
    %v2145 = vmul.f32 %v1808, %v1912
    %v2146 = vmul.f32 %v1813, %v1912
    %v2147 = vmul.f32 %v1816, %v1912
    %v2148 = vmul.f32 %v1821, %v1912
    %v2149 = vmul.f32 %v1824, %v1912
    %v2150 = vmul.f32 %v1829, %v1912
    %v2151 = vmul.f32 %v1832, %v1912
    %v2152 = vmul.f32 %v1837, %v1912
    %v2153 = vmul.f32 %v1840, %v1912
    %v2154 = vmul.f32 %v1845, %v1912
    %v2155 = vmul.f32 %v1848, %v1912
    %v2156 = vmul.f32 %v1853, %v1912
    %v2157 = vmul.f32 %v1856, %v1912
    %v2158 = vmul.f32 %v1861, %v1912
    %v2159 = vmul.f32 %v1864, %v1912
    %v2160 = vmul.f32 %v1869, %v1912
    %v2161 = vmul.f32 %v1872, %v1912
    %v2162 = vmul.f32 %v1877, %v1912
    %v2163 = vmul.f32 %v1880, %v1912
    %v2164 = vmul.f32 %v1885, %v1912
    %v2165 = vmul.f32 %v1888, %v1912
    %v2166 = vmul.f32 %v1893, %v1912
    %v2167 = vmul.f32 %v1896, %v1912
    %v2168 = vmul.f32 %v1901, %v1912
    %v2169 = vmul.f32 %v1904, %v1912
    %v2170 = vld [vmem:[%s3] sm:$0x1]
    %v2172 = vlaneseq
    %v2173 = vshrl.u32 %v2172, 7
    %v2174 = vsub.s32 0, %v2173
    %v2175 = vrot.slane %v2170, %v2174
    %v2177 = vadd.f32 %v1914, %v2175
    %v2178 = vadd.f32 %v1915, %v2175
    %v2179 = vadd.f32 %v1916, %v2175
    %v2180 = vadd.f32 %v1917, %v2175
    %v2181 = vadd.f32 %v1918, %v2175
    %v2182 = vadd.f32 %v1919, %v2175
    %v2183 = vadd.f32 %v1920, %v2175
    %v2184 = vadd.f32 %v1921, %v2175
    %v2185 = vadd.f32 %v1922, %v2175
    %v2186 = vadd.f32 %v1923, %v2175
    %v2187 = vadd.f32 %v1924, %v2175
    %v2188 = vadd.f32 %v1925, %v2175
    %v2189 = vadd.f32 %v1926, %v2175
    %v2190 = vadd.f32 %v1927, %v2175
    %v2191 = vadd.f32 %v1928, %v2175
    %v2192 = vadd.f32 %v1929, %v2175
    %v2193 = vadd.f32 %v1930, %v2175
    %v2194 = vadd.f32 %v1931, %v2175
    %v2195 = vadd.f32 %v1932, %v2175
    %v2196 = vadd.f32 %v1933, %v2175
    %v2197 = vadd.f32 %v1934, %v2175
    %v2198 = vadd.f32 %v1935, %v2175
    %v2199 = vadd.f32 %v1936, %v2175
    %v2200 = vadd.f32 %v1937, %v2175
    %v2201 = vadd.f32 %v1938, %v2175
    %v2202 = vadd.f32 %v1939, %v2175
    %v2203 = vadd.f32 %v1940, %v2175
    %v2204 = vadd.f32 %v1941, %v2175
    %v2205 = vadd.f32 %v1942, %v2175
    %v2206 = vadd.f32 %v1943, %v2175
    %v2207 = vadd.f32 %v1944, %v2175
    %v2208 = vadd.f32 %v1945, %v2175
    %v2209 = vadd.f32 %v1946, %v2175
    %v2210 = vadd.f32 %v1947, %v2175
    %v2211 = vadd.f32 %v1948, %v2175
    %v2212 = vadd.f32 %v1949, %v2175
    %v2213 = vadd.f32 %v1950, %v2175
    %v2214 = vadd.f32 %v1951, %v2175
    %v2215 = vadd.f32 %v1952, %v2175
    %v2216 = vadd.f32 %v1953, %v2175
    %v2217 = vadd.f32 %v1954, %v2175
    %v2218 = vadd.f32 %v1955, %v2175
    %v2219 = vadd.f32 %v1956, %v2175
    %v2220 = vadd.f32 %v1957, %v2175
    %v2221 = vadd.f32 %v1958, %v2175
    %v2222 = vadd.f32 %v1959, %v2175
    %v2223 = vadd.f32 %v1960, %v2175
    %v2224 = vadd.f32 %v1961, %v2175
    %v2225 = vadd.f32 %v1962, %v2175
    %v2226 = vadd.f32 %v1963, %v2175
    %v2227 = vadd.f32 %v1964, %v2175
    %v2228 = vadd.f32 %v1965, %v2175
    %v2229 = vadd.f32 %v1966, %v2175
    %v2230 = vadd.f32 %v1967, %v2175
    %v2231 = vadd.f32 %v1968, %v2175
    %v2232 = vadd.f32 %v1969, %v2175
    %v2233 = vadd.f32 %v1970, %v2175
    %v2234 = vadd.f32 %v1971, %v2175
    %v2235 = vadd.f32 %v1972, %v2175
    %v2236 = vadd.f32 %v1973, %v2175
    %v2237 = vadd.f32 %v1974, %v2175
    %v2238 = vadd.f32 %v1975, %v2175
    %v2239 = vadd.f32 %v1976, %v2175
    %v2240 = vadd.f32 %v1977, %v2175
    %v2241 = vadd.f32 %v1978, %v2175
    %v2242 = vadd.f32 %v1979, %v2175
    %v2243 = vadd.f32 %v1980, %v2175
    %v2244 = vadd.f32 %v1981, %v2175
    %v2245 = vadd.f32 %v1982, %v2175
    %v2246 = vadd.f32 %v1983, %v2175
    %v2247 = vadd.f32 %v1984, %v2175
    %v2248 = vadd.f32 %v1985, %v2175
    %v2249 = vadd.f32 %v1986, %v2175
    %v2250 = vadd.f32 %v1987, %v2175
    %v2251 = vadd.f32 %v1988, %v2175
    %v2252 = vadd.f32 %v1989, %v2175
    %v2253 = vadd.f32 %v1990, %v2175
    %v2254 = vadd.f32 %v1991, %v2175
    %v2255 = vadd.f32 %v1992, %v2175
    %v2256 = vadd.f32 %v1993, %v2175
    %v2257 = vadd.f32 %v1994, %v2175
    %v2258 = vadd.f32 %v1995, %v2175
    %v2259 = vadd.f32 %v1996, %v2175
    %v2260 = vadd.f32 %v1997, %v2175
    %v2261 = vadd.f32 %v1998, %v2175
    %v2262 = vadd.f32 %v1999, %v2175
    %v2263 = vadd.f32 %v2000, %v2175
    %v2264 = vadd.f32 %v2001, %v2175
    %v2265 = vadd.f32 %v2002, %v2175
    %v2266 = vadd.f32 %v2003, %v2175
    %v2267 = vadd.f32 %v2004, %v2175
    %v2268 = vadd.f32 %v2005, %v2175
    %v2269 = vadd.f32 %v2006, %v2175
    %v2270 = vadd.f32 %v2007, %v2175
    %v2271 = vadd.f32 %v2008, %v2175
    %v2272 = vadd.f32 %v2009, %v2175
    %v2273 = vadd.f32 %v2010, %v2175
    %v2274 = vadd.f32 %v2011, %v2175
    %v2275 = vadd.f32 %v2012, %v2175
    %v2276 = vadd.f32 %v2013, %v2175
    %v2277 = vadd.f32 %v2014, %v2175
    %v2278 = vadd.f32 %v2015, %v2175
    %v2279 = vadd.f32 %v2016, %v2175
    %v2280 = vadd.f32 %v2017, %v2175
    %v2281 = vadd.f32 %v2018, %v2175
    %v2282 = vadd.f32 %v2019, %v2175
    %v2283 = vadd.f32 %v2020, %v2175
    %v2284 = vadd.f32 %v2021, %v2175
    %v2285 = vadd.f32 %v2022, %v2175
    %v2286 = vadd.f32 %v2023, %v2175
    %v2287 = vadd.f32 %v2024, %v2175
    %v2288 = vadd.f32 %v2025, %v2175
    %v2289 = vadd.f32 %v2026, %v2175
    %v2290 = vadd.f32 %v2027, %v2175
    %v2291 = vadd.f32 %v2028, %v2175
    %v2292 = vadd.f32 %v2029, %v2175
    %v2293 = vadd.f32 %v2030, %v2175
    %v2294 = vadd.f32 %v2031, %v2175
    %v2295 = vadd.f32 %v2032, %v2175
    %v2296 = vadd.f32 %v2033, %v2175
    %v2297 = vadd.f32 %v2034, %v2175
    %v2298 = vadd.f32 %v2035, %v2175
    %v2299 = vadd.f32 %v2036, %v2175
    %v2300 = vadd.f32 %v2037, %v2175
    %v2301 = vadd.f32 %v2038, %v2175
    %v2302 = vadd.f32 %v2039, %v2175
    %v2303 = vadd.f32 %v2040, %v2175
    %v2304 = vadd.f32 %v2041, %v2175
    %v2305 = vadd.f32 %v2042, %v2175
    %v2306 = vadd.f32 %v2043, %v2175
    %v2307 = vadd.f32 %v2044, %v2175
    %v2308 = vadd.f32 %v2045, %v2175
    %v2309 = vadd.f32 %v2046, %v2175
    %v2310 = vadd.f32 %v2047, %v2175
    %v2311 = vadd.f32 %v2048, %v2175
    %v2312 = vadd.f32 %v2049, %v2175
    %v2313 = vadd.f32 %v2050, %v2175
    %v2314 = vadd.f32 %v2051, %v2175
    %v2315 = vadd.f32 %v2052, %v2175
    %v2316 = vadd.f32 %v2053, %v2175
    %v2317 = vadd.f32 %v2054, %v2175
    %v2318 = vadd.f32 %v2055, %v2175
    %v2319 = vadd.f32 %v2056, %v2175
    %v2320 = vadd.f32 %v2057, %v2175
    %v2321 = vadd.f32 %v2058, %v2175
    %v2322 = vadd.f32 %v2059, %v2175
    %v2323 = vadd.f32 %v2060, %v2175
    %v2324 = vadd.f32 %v2061, %v2175
    %v2325 = vadd.f32 %v2062, %v2175
    %v2326 = vadd.f32 %v2063, %v2175
    %v2327 = vadd.f32 %v2064, %v2175
    %v2328 = vadd.f32 %v2065, %v2175
    %v2329 = vadd.f32 %v2066, %v2175
    %v2330 = vadd.f32 %v2067, %v2175
    %v2331 = vadd.f32 %v2068, %v2175
    %v2332 = vadd.f32 %v2069, %v2175
    %v2333 = vadd.f32 %v2070, %v2175
    %v2334 = vadd.f32 %v2071, %v2175
    %v2335 = vadd.f32 %v2072, %v2175
    %v2336 = vadd.f32 %v2073, %v2175
    %v2337 = vadd.f32 %v2074, %v2175
    %v2338 = vadd.f32 %v2075, %v2175
    %v2339 = vadd.f32 %v2076, %v2175
    %v2340 = vadd.f32 %v2077, %v2175
    %v2341 = vadd.f32 %v2078, %v2175
    %v2342 = vadd.f32 %v2079, %v2175
    %v2343 = vadd.f32 %v2080, %v2175
    %v2344 = vadd.f32 %v2081, %v2175
    %v2345 = vadd.f32 %v2082, %v2175
    %v2346 = vadd.f32 %v2083, %v2175
    %v2347 = vadd.f32 %v2084, %v2175
    %v2348 = vadd.f32 %v2085, %v2175
    %v2349 = vadd.f32 %v2086, %v2175
    %v2350 = vadd.f32 %v2087, %v2175
    %v2351 = vadd.f32 %v2088, %v2175
    %v2352 = vadd.f32 %v2089, %v2175
    %v2353 = vadd.f32 %v2090, %v2175
    %v2354 = vadd.f32 %v2091, %v2175
    %v2355 = vadd.f32 %v2092, %v2175
    %v2356 = vadd.f32 %v2093, %v2175
    %v2357 = vadd.f32 %v2094, %v2175
    %v2358 = vadd.f32 %v2095, %v2175
    %v2359 = vadd.f32 %v2096, %v2175
    %v2360 = vadd.f32 %v2097, %v2175
    %v2361 = vadd.f32 %v2098, %v2175
    %v2362 = vadd.f32 %v2099, %v2175
    %v2363 = vadd.f32 %v2100, %v2175
    %v2364 = vadd.f32 %v2101, %v2175
    %v2365 = vadd.f32 %v2102, %v2175
    %v2366 = vadd.f32 %v2103, %v2175
    %v2367 = vadd.f32 %v2104, %v2175
    %v2368 = vadd.f32 %v2105, %v2175
    %v2369 = vadd.f32 %v2106, %v2175
    %v2370 = vadd.f32 %v2107, %v2175
    %v2371 = vadd.f32 %v2108, %v2175
    %v2372 = vadd.f32 %v2109, %v2175
    %v2373 = vadd.f32 %v2110, %v2175
    %v2374 = vadd.f32 %v2111, %v2175
    %v2375 = vadd.f32 %v2112, %v2175
    %v2376 = vadd.f32 %v2113, %v2175
    %v2377 = vadd.f32 %v2114, %v2175
    %v2378 = vadd.f32 %v2115, %v2175
    %v2379 = vadd.f32 %v2116, %v2175
    %v2380 = vadd.f32 %v2117, %v2175
    %v2381 = vadd.f32 %v2118, %v2175
    %v2382 = vadd.f32 %v2119, %v2175
    %v2383 = vadd.f32 %v2120, %v2175
    %v2384 = vadd.f32 %v2121, %v2175
    %v2385 = vadd.f32 %v2122, %v2175
    %v2386 = vadd.f32 %v2123, %v2175
    %v2387 = vadd.f32 %v2124, %v2175
    %v2388 = vadd.f32 %v2125, %v2175
    %v2389 = vadd.f32 %v2126, %v2175
    %v2390 = vadd.f32 %v2127, %v2175
    %v2391 = vadd.f32 %v2128, %v2175
    %v2392 = vadd.f32 %v2129, %v2175
    %v2393 = vadd.f32 %v2130, %v2175
    %v2394 = vadd.f32 %v2131, %v2175
    %v2395 = vadd.f32 %v2132, %v2175
    %v2396 = vadd.f32 %v2133, %v2175
    %v2397 = vadd.f32 %v2134, %v2175
    %v2398 = vadd.f32 %v2135, %v2175
    %v2399 = vadd.f32 %v2136, %v2175
    %v2400 = vadd.f32 %v2137, %v2175
    %v2401 = vadd.f32 %v2138, %v2175
    %v2402 = vadd.f32 %v2139, %v2175
    %v2403 = vadd.f32 %v2140, %v2175
    %v2404 = vadd.f32 %v2141, %v2175
    %v2405 = vadd.f32 %v2142, %v2175
    %v2406 = vadd.f32 %v2143, %v2175
    %v2407 = vadd.f32 %v2144, %v2175
    %v2408 = vadd.f32 %v2145, %v2175
    %v2409 = vadd.f32 %v2146, %v2175
    %v2410 = vadd.f32 %v2147, %v2175
    %v2411 = vadd.f32 %v2148, %v2175
    %v2412 = vadd.f32 %v2149, %v2175
    %v2413 = vadd.f32 %v2150, %v2175
    %v2414 = vadd.f32 %v2151, %v2175
    %v2415 = vadd.f32 %v2152, %v2175
    %v2416 = vadd.f32 %v2153, %v2175
    %v2417 = vadd.f32 %v2154, %v2175
    %v2418 = vadd.f32 %v2155, %v2175
    %v2419 = vadd.f32 %v2156, %v2175
    %v2420 = vadd.f32 %v2157, %v2175
    %v2421 = vadd.f32 %v2158, %v2175
    %v2422 = vadd.f32 %v2159, %v2175
    %v2423 = vadd.f32 %v2160, %v2175
    %v2424 = vadd.f32 %v2161, %v2175
    %v2425 = vadd.f32 %v2162, %v2175
    %v2426 = vadd.f32 %v2163, %v2175
    %v2427 = vadd.f32 %v2164, %v2175
    %v2428 = vadd.f32 %v2165, %v2175
    %v2429 = vadd.f32 %v2166, %v2175
    %v2430 = vadd.f32 %v2167, %v2175
    %v2431 = vadd.f32 %v2168, %v2175
    %v2432 = vadd.f32 %v2169, %v2175
    %v2433 = vmax.f32 %v2177, 0.0
    %v2434 = vmax.f32 %v2178, 0.0
    %v2435 = vmax.f32 %v2179, 0.0
    %v2436 = vmax.f32 %v2180, 0.0
    %v2437 = vmax.f32 %v2181, 0.0
    %v2438 = vmax.f32 %v2182, 0.0
    %v2439 = vmax.f32 %v2183, 0.0
    %v2440 = vmax.f32 %v2184, 0.0
    %v2441 = vmax.f32 %v2185, 0.0
    %v2442 = vmax.f32 %v2186, 0.0
    %v2443 = vmax.f32 %v2187, 0.0
    %v2444 = vmax.f32 %v2188, 0.0
    %v2445 = vmax.f32 %v2189, 0.0
    %v2446 = vmax.f32 %v2190, 0.0
    %v2447 = vmax.f32 %v2191, 0.0
    %v2448 = vmax.f32 %v2192, 0.0
    %v2449 = vmax.f32 %v2193, 0.0
    %v2450 = vmax.f32 %v2194, 0.0
    %v2451 = vmax.f32 %v2195, 0.0
    %v2452 = vmax.f32 %v2196, 0.0
    %v2453 = vmax.f32 %v2197, 0.0
    %v2454 = vmax.f32 %v2198, 0.0
    %v2455 = vmax.f32 %v2199, 0.0
    %v2456 = vmax.f32 %v2200, 0.0
    %v2457 = vmax.f32 %v2201, 0.0
    %v2458 = vmax.f32 %v2202, 0.0
    %v2459 = vmax.f32 %v2203, 0.0
    %v2460 = vmax.f32 %v2204, 0.0
    %v2461 = vmax.f32 %v2205, 0.0
    %v2462 = vmax.f32 %v2206, 0.0
    %v2463 = vmax.f32 %v2207, 0.0
    %v2464 = vmax.f32 %v2208, 0.0
    %v2465 = vmax.f32 %v2209, 0.0
    %v2466 = vmax.f32 %v2210, 0.0
    %v2467 = vmax.f32 %v2211, 0.0
    %v2468 = vmax.f32 %v2212, 0.0
    %v2469 = vmax.f32 %v2213, 0.0
    %v2470 = vmax.f32 %v2214, 0.0
    %v2471 = vmax.f32 %v2215, 0.0
    %v2472 = vmax.f32 %v2216, 0.0
    %v2473 = vmax.f32 %v2217, 0.0
    %v2474 = vmax.f32 %v2218, 0.0
    %v2475 = vmax.f32 %v2219, 0.0
    %v2476 = vmax.f32 %v2220, 0.0
    %v2477 = vmax.f32 %v2221, 0.0
    %v2478 = vmax.f32 %v2222, 0.0
    %v2479 = vmax.f32 %v2223, 0.0
    %v2480 = vmax.f32 %v2224, 0.0
    %v2481 = vmax.f32 %v2225, 0.0
    %v2482 = vmax.f32 %v2226, 0.0
    %v2483 = vmax.f32 %v2227, 0.0
    %v2484 = vmax.f32 %v2228, 0.0
    %v2485 = vmax.f32 %v2229, 0.0
    %v2486 = vmax.f32 %v2230, 0.0
    %v2487 = vmax.f32 %v2231, 0.0
    %v2488 = vmax.f32 %v2232, 0.0
    %v2489 = vmax.f32 %v2233, 0.0
    %v2490 = vmax.f32 %v2234, 0.0
    %v2491 = vmax.f32 %v2235, 0.0
    %v2492 = vmax.f32 %v2236, 0.0
    %v2493 = vmax.f32 %v2237, 0.0
    %v2494 = vmax.f32 %v2238, 0.0
    %v2495 = vmax.f32 %v2239, 0.0
    %v2496 = vmax.f32 %v2240, 0.0
    %v2497 = vmax.f32 %v2241, 0.0
    %v2498 = vmax.f32 %v2242, 0.0
    %v2499 = vmax.f32 %v2243, 0.0
    %v2500 = vmax.f32 %v2244, 0.0
    %v2501 = vmax.f32 %v2245, 0.0
    %v2502 = vmax.f32 %v2246, 0.0
    %v2503 = vmax.f32 %v2247, 0.0
    %v2504 = vmax.f32 %v2248, 0.0
    %v2505 = vmax.f32 %v2249, 0.0
    %v2506 = vmax.f32 %v2250, 0.0
    %v2507 = vmax.f32 %v2251, 0.0
    %v2508 = vmax.f32 %v2252, 0.0
    %v2509 = vmax.f32 %v2253, 0.0
    %v2510 = vmax.f32 %v2254, 0.0
    %v2511 = vmax.f32 %v2255, 0.0
    %v2512 = vmax.f32 %v2256, 0.0
    %v2513 = vmax.f32 %v2257, 0.0
    %v2514 = vmax.f32 %v2258, 0.0
    %v2515 = vmax.f32 %v2259, 0.0
    %v2516 = vmax.f32 %v2260, 0.0
    %v2517 = vmax.f32 %v2261, 0.0
    %v2518 = vmax.f32 %v2262, 0.0
    %v2519 = vmax.f32 %v2263, 0.0
    %v2520 = vmax.f32 %v2264, 0.0
    %v2521 = vmax.f32 %v2265, 0.0
    %v2522 = vmax.f32 %v2266, 0.0
    %v2523 = vmax.f32 %v2267, 0.0
    %v2524 = vmax.f32 %v2268, 0.0
    %v2525 = vmax.f32 %v2269, 0.0
    %v2526 = vmax.f32 %v2270, 0.0
    %v2527 = vmax.f32 %v2271, 0.0
    %v2528 = vmax.f32 %v2272, 0.0
    %v2529 = vmax.f32 %v2273, 0.0
    %v2530 = vmax.f32 %v2274, 0.0
    %v2531 = vmax.f32 %v2275, 0.0
    %v2532 = vmax.f32 %v2276, 0.0
    %v2533 = vmax.f32 %v2277, 0.0
    %v2534 = vmax.f32 %v2278, 0.0
    %v2535 = vmax.f32 %v2279, 0.0
    %v2536 = vmax.f32 %v2280, 0.0
    %v2537 = vmax.f32 %v2281, 0.0
    %v2538 = vmax.f32 %v2282, 0.0
    %v2539 = vmax.f32 %v2283, 0.0
    %v2540 = vmax.f32 %v2284, 0.0
    %v2541 = vmax.f32 %v2285, 0.0
    %v2542 = vmax.f32 %v2286, 0.0
    %v2543 = vmax.f32 %v2287, 0.0
    %v2544 = vmax.f32 %v2288, 0.0
    %v2545 = vmax.f32 %v2289, 0.0
    %v2546 = vmax.f32 %v2290, 0.0
    %v2547 = vmax.f32 %v2291, 0.0
    %v2548 = vmax.f32 %v2292, 0.0
    %v2549 = vmax.f32 %v2293, 0.0
    %v2550 = vmax.f32 %v2294, 0.0
    %v2551 = vmax.f32 %v2295, 0.0
    %v2552 = vmax.f32 %v2296, 0.0
    %v2553 = vmax.f32 %v2297, 0.0
    %v2554 = vmax.f32 %v2298, 0.0
    %v2555 = vmax.f32 %v2299, 0.0
    %v2556 = vmax.f32 %v2300, 0.0
    %v2557 = vmax.f32 %v2301, 0.0
    %v2558 = vmax.f32 %v2302, 0.0
    %v2559 = vmax.f32 %v2303, 0.0
    %v2560 = vmax.f32 %v2304, 0.0
    %v2561 = vmax.f32 %v2305, 0.0
    %v2562 = vmax.f32 %v2306, 0.0
    %v2563 = vmax.f32 %v2307, 0.0
    %v2564 = vmax.f32 %v2308, 0.0
    %v2565 = vmax.f32 %v2309, 0.0
    %v2566 = vmax.f32 %v2310, 0.0
    %v2567 = vmax.f32 %v2311, 0.0
    %v2568 = vmax.f32 %v2312, 0.0
    %v2569 = vmax.f32 %v2313, 0.0
    %v2570 = vmax.f32 %v2314, 0.0
    %v2571 = vmax.f32 %v2315, 0.0
    %v2572 = vmax.f32 %v2316, 0.0
    %v2573 = vmax.f32 %v2317, 0.0
    %v2574 = vmax.f32 %v2318, 0.0
    %v2575 = vmax.f32 %v2319, 0.0
    %v2576 = vmax.f32 %v2320, 0.0
    %v2577 = vmax.f32 %v2321, 0.0
    %v2578 = vmax.f32 %v2322, 0.0
    %v2579 = vmax.f32 %v2323, 0.0
    %v2580 = vmax.f32 %v2324, 0.0
    %v2581 = vmax.f32 %v2325, 0.0
    %v2582 = vmax.f32 %v2326, 0.0
    %v2583 = vmax.f32 %v2327, 0.0
    %v2584 = vmax.f32 %v2328, 0.0
    %v2585 = vmax.f32 %v2329, 0.0
    %v2586 = vmax.f32 %v2330, 0.0
    %v2587 = vmax.f32 %v2331, 0.0
    %v2588 = vmax.f32 %v2332, 0.0
    %v2589 = vmax.f32 %v2333, 0.0
    %v2590 = vmax.f32 %v2334, 0.0
    %v2591 = vmax.f32 %v2335, 0.0
    %v2592 = vmax.f32 %v2336, 0.0
    %v2593 = vmax.f32 %v2337, 0.0
    %v2594 = vmax.f32 %v2338, 0.0
    %v2595 = vmax.f32 %v2339, 0.0
    %v2596 = vmax.f32 %v2340, 0.0
    %v2597 = vmax.f32 %v2341, 0.0
    %v2598 = vmax.f32 %v2342, 0.0
    %v2599 = vmax.f32 %v2343, 0.0
    %v2600 = vmax.f32 %v2344, 0.0
    %v2601 = vmax.f32 %v2345, 0.0
    %v2602 = vmax.f32 %v2346, 0.0
    %v2603 = vmax.f32 %v2347, 0.0
    %v2604 = vmax.f32 %v2348, 0.0
    %v2605 = vmax.f32 %v2349, 0.0
    %v2606 = vmax.f32 %v2350, 0.0
    %v2607 = vmax.f32 %v2351, 0.0
    %v2608 = vmax.f32 %v2352, 0.0
    %v2609 = vmax.f32 %v2353, 0.0
    %v2610 = vmax.f32 %v2354, 0.0
    %v2611 = vmax.f32 %v2355, 0.0
    %v2612 = vmax.f32 %v2356, 0.0
    %v2613 = vmax.f32 %v2357, 0.0
    %v2614 = vmax.f32 %v2358, 0.0
    %v2615 = vmax.f32 %v2359, 0.0
    %v2616 = vmax.f32 %v2360, 0.0
    %v2617 = vmax.f32 %v2361, 0.0
    %v2618 = vmax.f32 %v2362, 0.0
    %v2619 = vmax.f32 %v2363, 0.0
    %v2620 = vmax.f32 %v2364, 0.0
    %v2621 = vmax.f32 %v2365, 0.0
    %v2622 = vmax.f32 %v2366, 0.0
    %v2623 = vmax.f32 %v2367, 0.0
    %v2624 = vmax.f32 %v2368, 0.0
    %v2625 = vmax.f32 %v2369, 0.0
    %v2626 = vmax.f32 %v2370, 0.0
    %v2627 = vmax.f32 %v2371, 0.0
    %v2628 = vmax.f32 %v2372, 0.0
    %v2629 = vmax.f32 %v2373, 0.0
    %v2630 = vmax.f32 %v2374, 0.0
    %v2631 = vmax.f32 %v2375, 0.0
    %v2632 = vmax.f32 %v2376, 0.0
    %v2633 = vmax.f32 %v2377, 0.0
    %v2634 = vmax.f32 %v2378, 0.0
    %v2635 = vmax.f32 %v2379, 0.0
    %v2636 = vmax.f32 %v2380, 0.0
    %v2637 = vmax.f32 %v2381, 0.0
    %v2638 = vmax.f32 %v2382, 0.0
    %v2639 = vmax.f32 %v2383, 0.0
    %v2640 = vmax.f32 %v2384, 0.0
    %v2641 = vmax.f32 %v2385, 0.0
    %v2642 = vmax.f32 %v2386, 0.0
    %v2643 = vmax.f32 %v2387, 0.0
    %v2644 = vmax.f32 %v2388, 0.0
    %v2645 = vmax.f32 %v2389, 0.0
    %v2646 = vmax.f32 %v2390, 0.0
    %v2647 = vmax.f32 %v2391, 0.0
    %v2648 = vmax.f32 %v2392, 0.0
    %v2649 = vmax.f32 %v2393, 0.0
    %v2650 = vmax.f32 %v2394, 0.0
    %v2651 = vmax.f32 %v2395, 0.0
    %v2652 = vmax.f32 %v2396, 0.0
    %v2653 = vmax.f32 %v2397, 0.0
    %v2654 = vmax.f32 %v2398, 0.0
    %v2655 = vmax.f32 %v2399, 0.0
    %v2656 = vmax.f32 %v2400, 0.0
    %v2657 = vmax.f32 %v2401, 0.0
    %v2658 = vmax.f32 %v2402, 0.0
    %v2659 = vmax.f32 %v2403, 0.0
    %v2660 = vmax.f32 %v2404, 0.0
    %v2661 = vmax.f32 %v2405, 0.0
    %v2662 = vmax.f32 %v2406, 0.0
    %v2663 = vmax.f32 %v2407, 0.0
    %v2664 = vmax.f32 %v2408, 0.0
    %v2665 = vmax.f32 %v2409, 0.0
    %v2666 = vmax.f32 %v2410, 0.0
    %v2667 = vmax.f32 %v2411, 0.0
    %v2668 = vmax.f32 %v2412, 0.0
    %v2669 = vmax.f32 %v2413, 0.0
    %v2670 = vmax.f32 %v2414, 0.0
    %v2671 = vmax.f32 %v2415, 0.0
    %v2672 = vmax.f32 %v2416, 0.0
    %v2673 = vmax.f32 %v2417, 0.0
    %v2674 = vmax.f32 %v2418, 0.0
    %v2675 = vmax.f32 %v2419, 0.0
    %v2676 = vmax.f32 %v2420, 0.0
    %v2677 = vmax.f32 %v2421, 0.0
    %v2678 = vmax.f32 %v2422, 0.0
    %v2679 = vmax.f32 %v2423, 0.0
    %v2680 = vmax.f32 %v2424, 0.0
    %v2681 = vmax.f32 %v2425, 0.0
    %v2682 = vmax.f32 %v2426, 0.0
    %v2683 = vmax.f32 %v2427, 0.0
    %v2684 = vmax.f32 %v2428, 0.0
    %v2685 = vmax.f32 %v2429, 0.0
    %v2686 = vmax.f32 %v2430, 0.0
    %v2687 = vmax.f32 %v2431, 0.0
    %v2688 = vmax.f32 %v2432, 0.0
    %vm2689 = vcmask 523264
    %2690 = vst.msk [vmem:[#allocation7] sm:$0xff] %vm2689, %v2433
    %2691 = vst.msk [vmem:[#allocation7 + $0x8] sm:$0xff] %vm2689, %v2434
    %2692 = vst.msk [vmem:[#allocation7 + $0x10] sm:$0xff] %vm2689, %v2435
    %2693 = vst.msk [vmem:[#allocation7 + $0x18] sm:$0xff] %vm2689, %v2436
    %2694 = vst.msk [vmem:[#allocation7 + $0x20] sm:$0xff] %vm2689, %v2437
    %2695 = vst.msk [vmem:[#allocation7 + $0x28] sm:$0xff] %vm2689, %v2438
    %2696 = vst.msk [vmem:[#allocation7 + $0x30] sm:$0xff] %vm2689, %v2439
    %2697 = vst.msk [vmem:[#allocation7 + $0x38] sm:$0xff] %vm2689, %v2440
    %2698 = vst.msk [vmem:[#allocation7 + $0x40] sm:$0xff] %vm2689, %v2441
    %2699 = vst.msk [vmem:[#allocation7 + $0x48] sm:$0xff] %vm2689, %v2442
    %2700 = vst.msk [vmem:[#allocation7 + $0x50] sm:$0xff] %vm2689, %v2443
    %2701 = vst.msk [vmem:[#allocation7 + $0x58] sm:$0xff] %vm2689, %v2444
    %2702 = vst.msk [vmem:[#allocation7 + $0x60] sm:$0xff] %vm2689, %v2445
    %2703 = vst.msk [vmem:[#allocation7 + $0x68] sm:$0xff] %vm2689, %v2446
    %2704 = vst.msk [vmem:[#allocation7 + $0x70] sm:$0xff] %vm2689, %v2447
    %2705 = vst.msk [vmem:[#allocation7 + $0x78] sm:$0xff] %vm2689, %v2448
    %2706 = vst.msk [vmem:[#allocation7 + $0x80] sm:$0xff] %vm2689, %v2449
    %2707 = vst.msk [vmem:[#allocation7 + $0x88] sm:$0xff] %vm2689, %v2450
    %2708 = vst.msk [vmem:[#allocation7 + $0x90] sm:$0xff] %vm2689, %v2451
    %2709 = vst.msk [vmem:[#allocation7 + $0x98] sm:$0xff] %vm2689, %v2452
    %2710 = vst.msk [vmem:[#allocation7 + $0xa0] sm:$0xff] %vm2689, %v2453
    %2711 = vst.msk [vmem:[#allocation7 + $0xa8] sm:$0xff] %vm2689, %v2454
    %2712 = vst.msk [vmem:[#allocation7 + $0xb0] sm:$0xff] %vm2689, %v2455
    %2713 = vst.msk [vmem:[#allocation7 + $0xb8] sm:$0xff] %vm2689, %v2456
    %2714 = vst.msk [vmem:[#allocation7 + $0xc0] sm:$0xff] %vm2689, %v2457
    %2715 = vst.msk [vmem:[#allocation7 + $0xc8] sm:$0xff] %vm2689, %v2458
    %2716 = vst.msk [vmem:[#allocation7 + $0xd0] sm:$0xff] %vm2689, %v2459
    %2717 = vst.msk [vmem:[#allocation7 + $0xd8] sm:$0xff] %vm2689, %v2460
    %2718 = vst.msk [vmem:[#allocation7 + $0xe0] sm:$0xff] %vm2689, %v2461
    %2719 = vst.msk [vmem:[#allocation7 + $0xe8] sm:$0xff] %vm2689, %v2462
    %2720 = vst.msk [vmem:[#allocation7 + $0xf0] sm:$0xff] %vm2689, %v2463
    %2721 = vst.msk [vmem:[#allocation7 + $0xf8] sm:$0xff] %vm2689, %v2464
    %2722 = vst.msk [vmem:[#allocation7 + $0x100] sm:$0xff] %vm2689, %v2465
    %2723 = vst.msk [vmem:[#allocation7 + $0x108] sm:$0xff] %vm2689, %v2466
    %2724 = vst.msk [vmem:[#allocation7 + $0x110] sm:$0xff] %vm2689, %v2467
    %2725 = vst.msk [vmem:[#allocation7 + $0x118] sm:$0xff] %vm2689, %v2468
    %2726 = vst.msk [vmem:[#allocation7 + $0x120] sm:$0xff] %vm2689, %v2469
    %2727 = vst.msk [vmem:[#allocation7 + $0x128] sm:$0xff] %vm2689, %v2470
    %2728 = vst.msk [vmem:[#allocation7 + $0x130] sm:$0xff] %vm2689, %v2471
    %2729 = vst.msk [vmem:[#allocation7 + $0x138] sm:$0xff] %vm2689, %v2472
    %2730 = vst.msk [vmem:[#allocation7 + $0x140] sm:$0xff] %vm2689, %v2473
    %2731 = vst.msk [vmem:[#allocation7 + $0x148] sm:$0xff] %vm2689, %v2474
    %2732 = vst.msk [vmem:[#allocation7 + $0x150] sm:$0xff] %vm2689, %v2475
    %2733 = vst.msk [vmem:[#allocation7 + $0x158] sm:$0xff] %vm2689, %v2476
    %2734 = vst.msk [vmem:[#allocation7 + $0x160] sm:$0xff] %vm2689, %v2477
    %2735 = vst.msk [vmem:[#allocation7 + $0x168] sm:$0xff] %vm2689, %v2478
    %2736 = vst.msk [vmem:[#allocation7 + $0x170] sm:$0xff] %vm2689, %v2479
    %2737 = vst.msk [vmem:[#allocation7 + $0x178] sm:$0xff] %vm2689, %v2480
    %2738 = vst.msk [vmem:[#allocation7 + $0x180] sm:$0xff] %vm2689, %v2481
    %2739 = vst.msk [vmem:[#allocation7 + $0x188] sm:$0xff] %vm2689, %v2482
    %2740 = vst.msk [vmem:[#allocation7 + $0x190] sm:$0xff] %vm2689, %v2483
    %2741 = vst.msk [vmem:[#allocation7 + $0x198] sm:$0xff] %vm2689, %v2484
    %2742 = vst.msk [vmem:[#allocation7 + $0x1a0] sm:$0xff] %vm2689, %v2485
    %2743 = vst.msk [vmem:[#allocation7 + $0x1a8] sm:$0xff] %vm2689, %v2486
    %2744 = vst.msk [vmem:[#allocation7 + $0x1b0] sm:$0xff] %vm2689, %v2487
    %2745 = vst.msk [vmem:[#allocation7 + $0x1b8] sm:$0xff] %vm2689, %v2488
    %2746 = vst.msk [vmem:[#allocation7 + $0x1c0] sm:$0xff] %vm2689, %v2489
    %2747 = vst.msk [vmem:[#allocation7 + $0x1c8] sm:$0xff] %vm2689, %v2490
    %2748 = vst.msk [vmem:[#allocation7 + $0x1d0] sm:$0xff] %vm2689, %v2491
    %2749 = vst.msk [vmem:[#allocation7 + $0x1d8] sm:$0xff] %vm2689, %v2492
    %2750 = vst.msk [vmem:[#allocation7 + $0x1e0] sm:$0xff] %vm2689, %v2493
    %2751 = vst.msk [vmem:[#allocation7 + $0x1e8] sm:$0xff] %vm2689, %v2494
    %2752 = vst.msk [vmem:[#allocation7 + $0x1f0] sm:$0xff] %vm2689, %v2495
    %2753 = vst.msk [vmem:[#allocation7 + $0x1f8] sm:$0xff] %vm2689, %v2496
    %2754 = vst.msk [vmem:[#allocation7 + $0x200] sm:$0xff] %vm2689, %v2497
    %2755 = vst.msk [vmem:[#allocation7 + $0x208] sm:$0xff] %vm2689, %v2498
    %2756 = vst.msk [vmem:[#allocation7 + $0x210] sm:$0xff] %vm2689, %v2499
    %2757 = vst.msk [vmem:[#allocation7 + $0x218] sm:$0xff] %vm2689, %v2500
    %2758 = vst.msk [vmem:[#allocation7 + $0x220] sm:$0xff] %vm2689, %v2501
    %2759 = vst.msk [vmem:[#allocation7 + $0x228] sm:$0xff] %vm2689, %v2502
    %2760 = vst.msk [vmem:[#allocation7 + $0x230] sm:$0xff] %vm2689, %v2503
    %2761 = vst.msk [vmem:[#allocation7 + $0x238] sm:$0xff] %vm2689, %v2504
    %2762 = vst.msk [vmem:[#allocation7 + $0x240] sm:$0xff] %vm2689, %v2505
    %2763 = vst.msk [vmem:[#allocation7 + $0x248] sm:$0xff] %vm2689, %v2506
    %2764 = vst.msk [vmem:[#allocation7 + $0x250] sm:$0xff] %vm2689, %v2507
    %2765 = vst.msk [vmem:[#allocation7 + $0x258] sm:$0xff] %vm2689, %v2508
    %2766 = vst.msk [vmem:[#allocation7 + $0x260] sm:$0xff] %vm2689, %v2509
    %2767 = vst.msk [vmem:[#allocation7 + $0x268] sm:$0xff] %vm2689, %v2510
    %2768 = vst.msk [vmem:[#allocation7 + $0x270] sm:$0xff] %vm2689, %v2511
    %2769 = vst.msk [vmem:[#allocation7 + $0x278] sm:$0xff] %vm2689, %v2512
    %2770 = vst.msk [vmem:[#allocation7 + $0x280] sm:$0xff] %vm2689, %v2513
    %2771 = vst.msk [vmem:[#allocation7 + $0x288] sm:$0xff] %vm2689, %v2514
    %2772 = vst.msk [vmem:[#allocation7 + $0x290] sm:$0xff] %vm2689, %v2515
    %2773 = vst.msk [vmem:[#allocation7 + $0x298] sm:$0xff] %vm2689, %v2516
    %2774 = vst.msk [vmem:[#allocation7 + $0x2a0] sm:$0xff] %vm2689, %v2517
    %2775 = vst.msk [vmem:[#allocation7 + $0x2a8] sm:$0xff] %vm2689, %v2518
    %2776 = vst.msk [vmem:[#allocation7 + $0x2b0] sm:$0xff] %vm2689, %v2519
    %2777 = vst.msk [vmem:[#allocation7 + $0x2b8] sm:$0xff] %vm2689, %v2520
    %2778 = vst.msk [vmem:[#allocation7 + $0x2c0] sm:$0xff] %vm2689, %v2521
    %2779 = vst.msk [vmem:[#allocation7 + $0x2c8] sm:$0xff] %vm2689, %v2522
    %2780 = vst.msk [vmem:[#allocation7 + $0x2d0] sm:$0xff] %vm2689, %v2523
    %2781 = vst.msk [vmem:[#allocation7 + $0x2d8] sm:$0xff] %vm2689, %v2524
    %2782 = vst.msk [vmem:[#allocation7 + $0x2e0] sm:$0xff] %vm2689, %v2525
    %2783 = vst.msk [vmem:[#allocation7 + $0x2e8] sm:$0xff] %vm2689, %v2526
    %2784 = vst.msk [vmem:[#allocation7 + $0x2f0] sm:$0xff] %vm2689, %v2527
    %2785 = vst.msk [vmem:[#allocation7 + $0x2f8] sm:$0xff] %vm2689, %v2528
    %2786 = vst.msk [vmem:[#allocation7 + $0x300] sm:$0xff] %vm2689, %v2529
    %2787 = vst.msk [vmem:[#allocation7 + $0x308] sm:$0xff] %vm2689, %v2530
    %2788 = vst.msk [vmem:[#allocation7 + $0x310] sm:$0xff] %vm2689, %v2531
    %2789 = vst.msk [vmem:[#allocation7 + $0x318] sm:$0xff] %vm2689, %v2532
    %2790 = vst.msk [vmem:[#allocation7 + $0x320] sm:$0xff] %vm2689, %v2533
    %2791 = vst.msk [vmem:[#allocation7 + $0x328] sm:$0xff] %vm2689, %v2534
    %2792 = vst.msk [vmem:[#allocation7 + $0x330] sm:$0xff] %vm2689, %v2535
    %2793 = vst.msk [vmem:[#allocation7 + $0x338] sm:$0xff] %vm2689, %v2536
    %2794 = vst.msk [vmem:[#allocation7 + $0x340] sm:$0xff] %vm2689, %v2537
    %2795 = vst.msk [vmem:[#allocation7 + $0x348] sm:$0xff] %vm2689, %v2538
    %2796 = vst.msk [vmem:[#allocation7 + $0x350] sm:$0xff] %vm2689, %v2539
    %2797 = vst.msk [vmem:[#allocation7 + $0x358] sm:$0xff] %vm2689, %v2540
    %2798 = vst.msk [vmem:[#allocation7 + $0x360] sm:$0xff] %vm2689, %v2541
    %2799 = vst.msk [vmem:[#allocation7 + $0x368] sm:$0xff] %vm2689, %v2542
    %2800 = vst.msk [vmem:[#allocation7 + $0x370] sm:$0xff] %vm2689, %v2543
    %2801 = vst.msk [vmem:[#allocation7 + $0x378] sm:$0xff] %vm2689, %v2544
    %2802 = vst.msk [vmem:[#allocation7 + $0x380] sm:$0xff] %vm2689, %v2545
    %2803 = vst.msk [vmem:[#allocation7 + $0x388] sm:$0xff] %vm2689, %v2546
    %2804 = vst.msk [vmem:[#allocation7 + $0x390] sm:$0xff] %vm2689, %v2547
    %2805 = vst.msk [vmem:[#allocation7 + $0x398] sm:$0xff] %vm2689, %v2548
    %2806 = vst.msk [vmem:[#allocation7 + $0x3a0] sm:$0xff] %vm2689, %v2549
    %2807 = vst.msk [vmem:[#allocation7 + $0x3a8] sm:$0xff] %vm2689, %v2550
    %2808 = vst.msk [vmem:[#allocation7 + $0x3b0] sm:$0xff] %vm2689, %v2551
    %2809 = vst.msk [vmem:[#allocation7 + $0x3b8] sm:$0xff] %vm2689, %v2552
    %2810 = vst.msk [vmem:[#allocation7 + $0x3c0] sm:$0xff] %vm2689, %v2553
    %2811 = vst.msk [vmem:[#allocation7 + $0x3c8] sm:$0xff] %vm2689, %v2554
    %2812 = vst.msk [vmem:[#allocation7 + $0x3d0] sm:$0xff] %vm2689, %v2555
    %2813 = vst.msk [vmem:[#allocation7 + $0x3d8] sm:$0xff] %vm2689, %v2556
    %2814 = vst.msk [vmem:[#allocation7 + $0x3e0] sm:$0xff] %vm2689, %v2557
    %2815 = vst.msk [vmem:[#allocation7 + $0x3e8] sm:$0xff] %vm2689, %v2558
    %2816 = vst.msk [vmem:[#allocation7 + $0x3f0] sm:$0xff] %vm2689, %v2559
    %2817 = vst.msk [vmem:[#allocation7 + $0x3f8] sm:$0xff] %vm2689, %v2560
    %2818 = vst.msk [vmem:[#allocation7 + $0x400] sm:$0xff] %vm2689, %v2561
    %2819 = vst.msk [vmem:[#allocation7 + $0x408] sm:$0xff] %vm2689, %v2562
    %2820 = vst.msk [vmem:[#allocation7 + $0x410] sm:$0xff] %vm2689, %v2563
    %2821 = vst.msk [vmem:[#allocation7 + $0x418] sm:$0xff] %vm2689, %v2564
    %2822 = vst.msk [vmem:[#allocation7 + $0x420] sm:$0xff] %vm2689, %v2565
    %2823 = vst.msk [vmem:[#allocation7 + $0x428] sm:$0xff] %vm2689, %v2566
    %2824 = vst.msk [vmem:[#allocation7 + $0x430] sm:$0xff] %vm2689, %v2567
    %2825 = vst.msk [vmem:[#allocation7 + $0x438] sm:$0xff] %vm2689, %v2568
    %2826 = vst.msk [vmem:[#allocation7 + $0x440] sm:$0xff] %vm2689, %v2569
    %2827 = vst.msk [vmem:[#allocation7 + $0x448] sm:$0xff] %vm2689, %v2570
    %2828 = vst.msk [vmem:[#allocation7 + $0x450] sm:$0xff] %vm2689, %v2571
    %2829 = vst.msk [vmem:[#allocation7 + $0x458] sm:$0xff] %vm2689, %v2572
    %2830 = vst.msk [vmem:[#allocation7 + $0x460] sm:$0xff] %vm2689, %v2573
    %2831 = vst.msk [vmem:[#allocation7 + $0x468] sm:$0xff] %vm2689, %v2574
    %2832 = vst.msk [vmem:[#allocation7 + $0x470] sm:$0xff] %vm2689, %v2575
    %2833 = vst.msk [vmem:[#allocation7 + $0x478] sm:$0xff] %vm2689, %v2576
    %2834 = vst.msk [vmem:[#allocation7 + $0x480] sm:$0xff] %vm2689, %v2577
    %2835 = vst.msk [vmem:[#allocation7 + $0x488] sm:$0xff] %vm2689, %v2578
    %2836 = vst.msk [vmem:[#allocation7 + $0x490] sm:$0xff] %vm2689, %v2579
    %2837 = vst.msk [vmem:[#allocation7 + $0x498] sm:$0xff] %vm2689, %v2580
    %2838 = vst.msk [vmem:[#allocation7 + $0x4a0] sm:$0xff] %vm2689, %v2581
    %2839 = vst.msk [vmem:[#allocation7 + $0x4a8] sm:$0xff] %vm2689, %v2582
    %2840 = vst.msk [vmem:[#allocation7 + $0x4b0] sm:$0xff] %vm2689, %v2583
    %2841 = vst.msk [vmem:[#allocation7 + $0x4b8] sm:$0xff] %vm2689, %v2584
    %2842 = vst.msk [vmem:[#allocation7 + $0x4c0] sm:$0xff] %vm2689, %v2585
    %2843 = vst.msk [vmem:[#allocation7 + $0x4c8] sm:$0xff] %vm2689, %v2586
    %2844 = vst.msk [vmem:[#allocation7 + $0x4d0] sm:$0xff] %vm2689, %v2587
    %2845 = vst.msk [vmem:[#allocation7 + $0x4d8] sm:$0xff] %vm2689, %v2588
    %2846 = vst.msk [vmem:[#allocation7 + $0x4e0] sm:$0xff] %vm2689, %v2589
    %2847 = vst.msk [vmem:[#allocation7 + $0x4e8] sm:$0xff] %vm2689, %v2590
    %2848 = vst.msk [vmem:[#allocation7 + $0x4f0] sm:$0xff] %vm2689, %v2591
    %2849 = vst.msk [vmem:[#allocation7 + $0x4f8] sm:$0xff] %vm2689, %v2592
    %2850 = vst.msk [vmem:[#allocation7 + $0x500] sm:$0xff] %vm2689, %v2593
    %2851 = vst.msk [vmem:[#allocation7 + $0x508] sm:$0xff] %vm2689, %v2594
    %2852 = vst.msk [vmem:[#allocation7 + $0x510] sm:$0xff] %vm2689, %v2595
    %2853 = vst.msk [vmem:[#allocation7 + $0x518] sm:$0xff] %vm2689, %v2596
    %2854 = vst.msk [vmem:[#allocation7 + $0x520] sm:$0xff] %vm2689, %v2597
    %2855 = vst.msk [vmem:[#allocation7 + $0x528] sm:$0xff] %vm2689, %v2598
    %2856 = vst.msk [vmem:[#allocation7 + $0x530] sm:$0xff] %vm2689, %v2599
    %2857 = vst.msk [vmem:[#allocation7 + $0x538] sm:$0xff] %vm2689, %v2600
    %2858 = vst.msk [vmem:[#allocation7 + $0x540] sm:$0xff] %vm2689, %v2601
    %2859 = vst.msk [vmem:[#allocation7 + $0x548] sm:$0xff] %vm2689, %v2602
    %2860 = vst.msk [vmem:[#allocation7 + $0x550] sm:$0xff] %vm2689, %v2603
    %2861 = vst.msk [vmem:[#allocation7 + $0x558] sm:$0xff] %vm2689, %v2604
    %2862 = vst.msk [vmem:[#allocation7 + $0x560] sm:$0xff] %vm2689, %v2605
    %2863 = vst.msk [vmem:[#allocation7 + $0x568] sm:$0xff] %vm2689, %v2606
    %2864 = vst.msk [vmem:[#allocation7 + $0x570] sm:$0xff] %vm2689, %v2607
    %2865 = vst.msk [vmem:[#allocation7 + $0x578] sm:$0xff] %vm2689, %v2608
    %2866 = vst.msk [vmem:[#allocation7 + $0x580] sm:$0xff] %vm2689, %v2609
    %2867 = vst.msk [vmem:[#allocation7 + $0x588] sm:$0xff] %vm2689, %v2610
    %2868 = vst.msk [vmem:[#allocation7 + $0x590] sm:$0xff] %vm2689, %v2611
    %2869 = vst.msk [vmem:[#allocation7 + $0x598] sm:$0xff] %vm2689, %v2612
    %2870 = vst.msk [vmem:[#allocation7 + $0x5a0] sm:$0xff] %vm2689, %v2613
    %2871 = vst.msk [vmem:[#allocation7 + $0x5a8] sm:$0xff] %vm2689, %v2614
    %2872 = vst.msk [vmem:[#allocation7 + $0x5b0] sm:$0xff] %vm2689, %v2615
    %2873 = vst.msk [vmem:[#allocation7 + $0x5b8] sm:$0xff] %vm2689, %v2616
    %2874 = vst.msk [vmem:[#allocation7 + $0x5c0] sm:$0xff] %vm2689, %v2617
    %2875 = vst.msk [vmem:[#allocation7 + $0x5c8] sm:$0xff] %vm2689, %v2618
    %2876 = vst.msk [vmem:[#allocation7 + $0x5d0] sm:$0xff] %vm2689, %v2619
    %2877 = vst.msk [vmem:[#allocation7 + $0x5d8] sm:$0xff] %vm2689, %v2620
    %2878 = vst.msk [vmem:[#allocation7 + $0x5e0] sm:$0xff] %vm2689, %v2621
    %2879 = vst.msk [vmem:[#allocation7 + $0x5e8] sm:$0xff] %vm2689, %v2622
    %2880 = vst.msk [vmem:[#allocation7 + $0x5f0] sm:$0xff] %vm2689, %v2623
    %2881 = vst.msk [vmem:[#allocation7 + $0x5f8] sm:$0xff] %vm2689, %v2624
    %2882 = vst.msk [vmem:[#allocation7 + $0x600] sm:$0xff] %vm2689, %v2625
    %2883 = vst.msk [vmem:[#allocation7 + $0x608] sm:$0xff] %vm2689, %v2626
    %2884 = vst.msk [vmem:[#allocation7 + $0x610] sm:$0xff] %vm2689, %v2627
    %2885 = vst.msk [vmem:[#allocation7 + $0x618] sm:$0xff] %vm2689, %v2628
    %2886 = vst.msk [vmem:[#allocation7 + $0x620] sm:$0xff] %vm2689, %v2629
    %2887 = vst.msk [vmem:[#allocation7 + $0x628] sm:$0xff] %vm2689, %v2630
    %2888 = vst.msk [vmem:[#allocation7 + $0x630] sm:$0xff] %vm2689, %v2631
    %2889 = vst.msk [vmem:[#allocation7 + $0x638] sm:$0xff] %vm2689, %v2632
    %2890 = vst.msk [vmem:[#allocation7 + $0x640] sm:$0xff] %vm2689, %v2633
    %2891 = vst.msk [vmem:[#allocation7 + $0x648] sm:$0xff] %vm2689, %v2634
    %2892 = vst.msk [vmem:[#allocation7 + $0x650] sm:$0xff] %vm2689, %v2635
    %2893 = vst.msk [vmem:[#allocation7 + $0x658] sm:$0xff] %vm2689, %v2636
    %2894 = vst.msk [vmem:[#allocation7 + $0x660] sm:$0xff] %vm2689, %v2637
    %2895 = vst.msk [vmem:[#allocation7 + $0x668] sm:$0xff] %vm2689, %v2638
    %2896 = vst.msk [vmem:[#allocation7 + $0x670] sm:$0xff] %vm2689, %v2639
    %2897 = vst.msk [vmem:[#allocation7 + $0x678] sm:$0xff] %vm2689, %v2640
    %2898 = vst.msk [vmem:[#allocation7 + $0x680] sm:$0xff] %vm2689, %v2641
    %2899 = vst.msk [vmem:[#allocation7 + $0x688] sm:$0xff] %vm2689, %v2642
    %2900 = vst.msk [vmem:[#allocation7 + $0x690] sm:$0xff] %vm2689, %v2643
    %2901 = vst.msk [vmem:[#allocation7 + $0x698] sm:$0xff] %vm2689, %v2644
    %2902 = vst.msk [vmem:[#allocation7 + $0x6a0] sm:$0xff] %vm2689, %v2645
    %2903 = vst.msk [vmem:[#allocation7 + $0x6a8] sm:$0xff] %vm2689, %v2646
    %2904 = vst.msk [vmem:[#allocation7 + $0x6b0] sm:$0xff] %vm2689, %v2647
    %2905 = vst.msk [vmem:[#allocation7 + $0x6b8] sm:$0xff] %vm2689, %v2648
    %2906 = vst.msk [vmem:[#allocation7 + $0x6c0] sm:$0xff] %vm2689, %v2649
    %2907 = vst.msk [vmem:[#allocation7 + $0x6c8] sm:$0xff] %vm2689, %v2650
    %2908 = vst.msk [vmem:[#allocation7 + $0x6d0] sm:$0xff] %vm2689, %v2651
    %2909 = vst.msk [vmem:[#allocation7 + $0x6d8] sm:$0xff] %vm2689, %v2652
    %2910 = vst.msk [vmem:[#allocation7 + $0x6e0] sm:$0xff] %vm2689, %v2653
    %2911 = vst.msk [vmem:[#allocation7 + $0x6e8] sm:$0xff] %vm2689, %v2654
    %2912 = vst.msk [vmem:[#allocation7 + $0x6f0] sm:$0xff] %vm2689, %v2655
    %2913 = vst.msk [vmem:[#allocation7 + $0x6f8] sm:$0xff] %vm2689, %v2656
    %2914 = vst.msk [vmem:[#allocation7 + $0x700] sm:$0xff] %vm2689, %v2657
    %2915 = vst.msk [vmem:[#allocation7 + $0x708] sm:$0xff] %vm2689, %v2658
    %2916 = vst.msk [vmem:[#allocation7 + $0x710] sm:$0xff] %vm2689, %v2659
    %2917 = vst.msk [vmem:[#allocation7 + $0x718] sm:$0xff] %vm2689, %v2660
    %2918 = vst.msk [vmem:[#allocation7 + $0x720] sm:$0xff] %vm2689, %v2661
    %2919 = vst.msk [vmem:[#allocation7 + $0x728] sm:$0xff] %vm2689, %v2662
    %2920 = vst.msk [vmem:[#allocation7 + $0x730] sm:$0xff] %vm2689, %v2663
    %2921 = vst.msk [vmem:[#allocation7 + $0x738] sm:$0xff] %vm2689, %v2664
    %2922 = vst.msk [vmem:[#allocation7 + $0x740] sm:$0xff] %vm2689, %v2665
    %2923 = vst.msk [vmem:[#allocation7 + $0x748] sm:$0xff] %vm2689, %v2666
    %2924 = vst.msk [vmem:[#allocation7 + $0x750] sm:$0xff] %vm2689, %v2667
    %2925 = vst.msk [vmem:[#allocation7 + $0x758] sm:$0xff] %vm2689, %v2668
    %2926 = vst.msk [vmem:[#allocation7 + $0x760] sm:$0xff] %vm2689, %v2669
    %2927 = vst.msk [vmem:[#allocation7 + $0x768] sm:$0xff] %vm2689, %v2670
    %2928 = vst.msk [vmem:[#allocation7 + $0x770] sm:$0xff] %vm2689, %v2671
    %2929 = vst.msk [vmem:[#allocation7 + $0x778] sm:$0xff] %vm2689, %v2672
    %2930 = vst.msk [vmem:[#allocation7 + $0x780] sm:$0xff] %vm2689, %v2673
    %2931 = vst.msk [vmem:[#allocation7 + $0x788] sm:$0xff] %vm2689, %v2674
    %2932 = vst.msk [vmem:[#allocation7 + $0x790] sm:$0xff] %vm2689, %v2675
    %2933 = vst.msk [vmem:[#allocation7 + $0x798] sm:$0xff] %vm2689, %v2676
    %2934 = vst.msk [vmem:[#allocation7 + $0x7a0] sm:$0xff] %vm2689, %v2677
    %2935 = vst.msk [vmem:[#allocation7 + $0x7a8] sm:$0xff] %vm2689, %v2678
    %2936 = vst.msk [vmem:[#allocation7 + $0x7b0] sm:$0xff] %vm2689, %v2679
    %2937 = vst.msk [vmem:[#allocation7 + $0x7b8] sm:$0xff] %vm2689, %v2680
    %2938 = vst.msk [vmem:[#allocation7 + $0x7c0] sm:$0xff] %vm2689, %v2681
    %2939 = vst.msk [vmem:[#allocation7 + $0x7c8] sm:$0xff] %vm2689, %v2682
    %2940 = vst.msk [vmem:[#allocation7 + $0x7d0] sm:$0xff] %vm2689, %v2683
    %2941 = vst.msk [vmem:[#allocation7 + $0x7d8] sm:$0xff] %vm2689, %v2684
    %2942 = vst.msk [vmem:[#allocation7 + $0x7e0] sm:$0xff] %vm2689, %v2685
    %2943 = vst.msk [vmem:[#allocation7 + $0x7e8] sm:$0xff] %vm2689, %v2686
    %2944 = vst.msk [vmem:[#allocation7 + $0x7f0] sm:$0xff] %vm2689, %v2687
    %2945 = vst.msk [vmem:[#allocation7 + $0x7f8] sm:$0xff] %vm2689, %v2688
    // Predicated region
    $region26: #{tpu_custom_call.1} parent=1 // pred_check
      _
    $region27: #{tpu_custom_call.1} parent=1 // pred_check_branch
      %2947 = sbr.rel (0) target = $region29
    $region28: #{tpu_custom_call.1} parent=1 // pred_region
      %s2949 = ssub.s32 32768, 32768
      %2950 = vsyncadd [#allocation4], %s2949
      %s2951 = sshll.u32 [#allocation7], 4
      %s2952 = int_to_ptr.vmem [resolvable:$true] %s2951
      %2957 = dma.vmem_to_hbm [thread:$0]  %s2952, 32768, %s4, [#allocation4], 128, 128, 8
    $region29: #{tpu_custom_call.1} parent=1 // pred_fallthru
      _
    // Predicated region
    $region30: #{tpu_custom_call.1} parent=1 // pred_check
      _
    $region31: #{tpu_custom_call.1} parent=1 // pred_check_branch
      %2959 = sbr.rel (0) target = $region33
    $region32: #{tpu_custom_call.1} parent=1 // pred_region
      %2960 = dma.done [#allocation4], 32768
    $region33: #{tpu_custom_call.1} parent=1 // pred_fallthru
      _
    %2961 = vsyncpa [#allocation3], 1
    %2962 = vsyncpa [#allocation6], 1
    %2963 = vsyncpa [#allocation4], 1

</llo_original>
